<compile_context>
chip_gen: v6e
topology: v6e:2x2x1
jax: 0.10.0
libtpu: 0.0.40
codegen_flags: <defaults>
</compile_context>

<pallas_src>
import jax
import jax.numpy as jnp
from jax import lax
from jax.experimental import pallas as pl
from jax.experimental.pallas import tpu as pltpu

DROPOUT = 0.3
LOSS_SCALE = 0.1

# murmur3 fmix32 constants (as signed int32 so the kernel only needs int32 ops).
_MIX1 = -1640531535   # 0x9E3779B1
_MIX2 = -2048144789   # 0x85EBCA6B
_MIX3 = -1028477387   # 0xC2B2AE35


def _srl32(h, n):
    """Logical right shift of an int32 array by a constant n (via mask trick)."""
    return jnp.bitwise_and(jnp.right_shift(h, n), jnp.int32((1 << (32 - n)) - 1))


def _keep_masks(idx, seed, thresh):
    """Two decorrelated Bernoulli(keep) masks per element from one 32-bit hash.

    idx, seed: int32.  Keep probability is quantised to 16 bits
    (|error| <= 2^-16, negligible vs. p=0.3).  Pure jnp int32 ops so it lowers
    on Mosaic TPU and is usable as a host-side reference.
    """
    h = idx * jnp.int32(_MIX1) + seed
    h = jnp.bitwise_xor(h, _srl32(h, 16))
    h = h * jnp.int32(_MIX2)
    h = jnp.bitwise_xor(h, _srl32(h, 13))
    h = h * jnp.int32(_MIX3)
    h = jnp.bitwise_xor(h, _srl32(h, 16))
    lo = jnp.bitwise_and(h, jnp.int32(0xFFFF))   # bits  0..15 -> draw #1
    hi = _srl32(h, 16)                           # bits 16..31 -> draw #2
    thr = jnp.int32(thresh)
    return lo >= thr, hi >= thr


def _pick_tile(dim, preferred):
    for t in preferred:
        if dim % t == 0:
            return t
    return dim  # fall back to the full (untiled) dimension


def _make_kernel(*, tm, tk, d_in, thresh, inv_keep, cache_x):
    def masked_pair(x, i, k, seed):
        # Returns (2*tm, tk): rows [0:tm] = dropout draw #1 (unscaled),
        #                     rows [tm:]  = draw #2 - draw #1.
        # Global element indices of this x tile -- independent of the D_out grid
        # index j, so every output-column tile sees the same dropout draw of x
        # (torch: dropout(x) is sampled once, then the Linear is applied).
        row = lax.broadcasted_iota(jnp.int32, x.shape, 0) + i * tm
        col = lax.broadcasted_iota(jnp.int32, x.shape, 1) + k * tk
        idx = row * jnp.int32(d_in) + col
        keep1, keep2 = _keep_masks(idx, seed, thresh)
        zero = jnp.zeros_like(x)
        x1 = jnp.where(keep1, x, zero)        # dropout draw #1 (unscaled)
        xd = jnp.where(keep2, x, zero) - x1   # draw #2 - draw #1
        return jnp.concatenate([x1, xd], axis=0)

    def finalize(acc_ref, b_ref, out_ref, losspart_ref):
        acc = acc_ref[...] * inv_keep          # fold 1/keep once, post-matmul
        y1 = acc[:tm, :] + b_ref[...].astype(jnp.float32)
        d = acc[tm:, :]                        # y2 - y1 (bias cancels exactly)
        out_ref[...] = y1.astype(out_ref.dtype)
        # Lane-dense per-tile partial sum of squared differences.
        losspart_ref[...] = jnp.broadcast_to(jnp.sum(d * d), losspart_ref.shape)

    if cache_x:
        def kernel(seed_ref, x_ref, w_ref, b_ref, out_ref, losspart_ref,
                   acc_ref, xz_ref):
            i = pl.program_id(0)
            j = pl.program_id(1)
            k = pl.program_id(2)
            nk = pl.num_programs(2)

            @pl.when(k == 0)
            def _init():
                acc_ref[...] = jnp.zeros_like(acc_ref)

            # Hash + masking VALU work only once per (i, k); reused for all j > 0.
            @pl.when(j == 0)
            def _mask():
                xz_ref[k] = masked_pair(
                    x_ref[...], i, k, seed_ref[0]).astype(xz_ref.dtype)

            # One MXU push for both y1 and (y2 - y1).
            acc_ref[...] += jnp.dot(xz_ref[k], w_ref[...],
                                    preferred_element_type=jnp.float32)

            @pl.when(k == nk - 1)
            def _fin():
                finalize(acc_ref, b_ref, out_ref, losspart_ref)
    else:
        def kernel(seed_ref, x_ref, w_ref, b_ref, out_ref, losspart_ref, acc_ref):
            i = pl.program_id(0)
            k = pl.program_id(2)
            nk = pl.num_programs(2)

            @pl.when(k == 0)
            def _init():
                acc_ref[...] = jnp.zeros_like(acc_ref)

            z = masked_pair(x_ref[...], i, k, seed_ref[0])
            acc_ref[...] += jnp.dot(z, w_ref[...],
                                    preferred_element_type=jnp.float32)

            @pl.when(k == nk - 1)
            def _fin():
                finalize(acc_ref, b_ref, out_ref, losspart_ref)

    return kernel


def decussation_forward(seed, x, w, b, *, dropout=DROPOUT, loss_scale=LOSS_SCALE):
    """Training-mode Decussation forward. Returns (output, scaled decussation loss)."""
    B, D_in = x.shape
    D_in_w, D_out = w.shape
    assert D_in_w == D_in and b.shape == (1, D_out)

    # MXU-friendly tiles, falling back to the full dim for small/odd shapes so the
    # (8,128) block constraints are always satisfied.
    tm = _pick_tile(B, (256, 128, 64, 32, 16, 8))
    if B // tm < 2:
        # Prefer >= 2 batch tiles so the "parallel" i axis can shard across the
        # two TensorCores on v7x (j/k are "arbitrary" in the cached path).
        for t in (128, 64, 32, 16, 8):
            if t < tm and B % t == 0:
                tm = t
                break
    tn = _pick_tile(D_out, (256, 128))
    tk = _pick_tile(D_in, (256, 128))
    nb, nn, nk = B // tm, D_out // tn, D_in // tk

    thresh = int(round(dropout * 65536.0))
    inv_keep = 1.0 / (1.0 - dropout)

    # Cache the masked activations for a whole batch strip in VMEM when there is
    # more than one output-column tile and the strip fits comfortably.
    xz_bytes = 2 * tm * D_in * x.dtype.itemsize
    cache_x = (nn > 1) and (xz_bytes <= (16 << 20))

    kernel = _make_kernel(tm=tm, tk=tk, d_in=D_in, thresh=thresh,
                          inv_keep=inv_keep, cache_x=cache_x)

    scratch_shapes = [pltpu.VMEM((2 * tm, tn), jnp.float32)]   # [y1_acc ; d_acc]
    if cache_x:
        scratch_shapes.append(pltpu.VMEM((nk, 2 * tm, tk), x.dtype))

    dim_sem = (("parallel", "arbitrary", "arbitrary") if cache_x
               else ("parallel", "parallel", "arbitrary"))

    out, loss_tiles = pl.pallas_call(
        kernel,
        out_shape=(
            jax.ShapeDtypeStruct((B, D_out), x.dtype),
            # per-(i,j)-tile partial sums, one lane-dense (8,128) block per tile
            jax.ShapeDtypeStruct((nb * 8, nn * 128), jnp.float32),
        ),
        grid_spec=pltpu.PrefetchScalarGridSpec(
            num_scalar_prefetch=1,                 # seed -> SMEM
            grid=(nb, nn, nk),
            in_specs=[
                pl.BlockSpec((tm, tk), lambda i, j, k, s: (i, k)),   # x
                pl.BlockSpec((tk, tn), lambda i, j, k, s: (k, j)),   # W
                pl.BlockSpec((1, tn), lambda i, j, k, s: (0, j)),    # b
            ],
            out_specs=(
                pl.BlockSpec((tm, tn), lambda i, j, k, s: (i, j)),   # y1
                pl.BlockSpec((8, 128), lambda i, j, k, s: (i, j)),   # loss partials
            ),
            scratch_shapes=scratch_shapes,
        ),
        compiler_params=pltpu.CompilerParams(
            dimension_semantics=dim_sem,
            # Explicit VMEM budget, sized well under v7x's 64 MiB physical VMEM.
            vmem_limit_bytes=48 * 1024 * 1024,
        ),
    )(seed, x, w, b)

    partials = loss_tiles[::8, ::128]                      # (nb, nn)
    loss = partials.sum() * (loss_scale / (B * D_out))     # mean((y2-y1)^2) * scale
    return out, loss


if __name__ == "__main__":
    # Small, but exercises batch tiling, >1 output-column tile (cached path) and
    # the D_in reduction axis: grid (2, 2, 2).
    B, D_in, D_out = 256, 512, 512

    key = jax.random.PRNGKey(0)
    kx, kw, kb = jax.random.split(key, 3)
    x = jax.random.normal(kx, (B, D_in), dtype=jnp.float32)
    w = jax.random.normal(kw, (D_in, D_out), dtype=jnp.float32) * 0.05
    b = jax.random.normal(kb, (1, D_out), dtype=jnp.float32) * 0.01
    seed = jnp.array([1234], dtype=jnp.int32)

    out, loss = decussation_forward(seed, x, w, b)
    jax.block_until_ready((out, loss))

    # Pure-JAX reference using the exact same hash-based dropout masks.
    idx_full = (jnp.arange(B, dtype=jnp.int32)[:, None] * jnp.int32(D_in)
                + jnp.arange(D_in, dtype=jnp.int32)[None, :])
    thr = int(round(DROPOUT * 65536.0))
    k1, k2 = _keep_masks(idx_full, seed[0], thr)
    inv_keep = 1.0 / (1.0 - DROPOUT)
    x1_ref = jnp.where(k1, x, 0.0) * inv_keep
    x2_ref = jnp.where(k2, x, 0.0) * inv_keep
    y1_ref = x1_ref @ w + b
    y2_ref = x2_ref @ w + b
    loss_ref = jnp.mean((y2_ref - y1_ref) ** 2) * LOSS_SCALE

    assert out.shape == (B, D_out)
    assert bool(jnp.all(jnp.isfinite(out)))
    assert bool(jnp.isfinite(loss))
    assert bool(jnp.allclose(out, y1_ref, atol=5e-2, rtol=5e-2)), "output mismatch"
    assert bool(jnp.allclose(loss, loss_ref, atol=5e-2, rtol=5e-2)), "loss mismatch"

    print("KERNEL_OK")
</pallas_src>

<mosaic_0001>
module attributes {stable_mosaic.version = 11 : i64} {
  func.func @kernel(%arg0: i32, %arg1: i32, %arg2: i32, %arg3: memref<1xi32, #tpu.memory_space<smem>>, %arg4: memref<128x256xf32, #tpu.memory_space<vmem>>, %arg5: memref<256x256xf32, #tpu.memory_space<vmem>>, %arg6: memref<1x256xf32, #tpu.memory_space<vmem>>, %arg7: memref<128x256xf32, #tpu.memory_space<vmem>>, %arg8: memref<8x128xf32, #tpu.memory_space<vmem>>, %arg9: memref<256x256xf32, #tpu.memory_space<vmem>>, %arg10: memref<2x256x256xf32, #tpu.memory_space<vmem>>) attributes {dimension_semantics = [#tpu.dimension_semantics<parallel>, #tpu.dimension_semantics<arbitrary>, #tpu.dimension_semantics<arbitrary>], iteration_bounds = array<i64: 2, 2, 2>, scalar_prefetch = 1 : i64, scratch_operands = 2 : i64, tpu.core_type = #tpu.core_type<tc>, window_params = [{transform_indices = @transform_0, window_bounds = array<i64: 128, 256>}, {transform_indices = @transform_1, window_bounds = array<i64: 256, 256>}, {transform_indices = @transform_2, window_bounds = array<i64: 1, 256>}, {transform_indices = @transform_3, window_bounds = array<i64: 128, 256>}, {transform_indices = @transform_4, window_bounds = array<i64: 8, 128>}]} {
    %c0_i32 = arith.constant 0 : i32
    %0 = arith.cmpi eq, %arg2, %c0_i32 : i32
    %1 = arith.extui %0 : i1 to i32
    %c0_i32_0 = arith.constant 0 : i32
    %2 = arith.cmpi ne, %1, %c0_i32_0 : i32
    scf.if %2 {
      %cst_11 = arith.constant 0.000000e+00 : f32
      %17 = vector.broadcast %cst_11 : f32 to vector<256x256xf32>
      %c0_12 = arith.constant 0 : index
      %c0_13 = arith.constant 0 : index
      %18 = vector.load %arg9[%c0_12, %c0_13] : memref<256x256xf32, #tpu.memory_space<vmem>>, vector<256x256xf32>
      tpu.vector_store %arg9[%c0_12, %c0_13], %17 {strides = array<i32>} : memref<256x256xf32, #tpu.memory_space<vmem>>, vector<256x256xf32>,
    } else {
    }
    %c0_i32_1 = arith.constant 0 : i32
    %3 = arith.cmpi eq, %arg1, %c0_i32_1 : i32
    %4 = arith.extui %3 : i1 to i32
    %c0_i32_2 = arith.constant 0 : i32
    %5 = arith.cmpi ne, %4, %c0_i32_2 : i32
    scf.if %5 {
      %c0_11 = arith.constant 0 : index
      %c0_12 = arith.constant 0 : index
      %17 = vector.load %arg4[%c0_11, %c0_12] : memref<128x256xf32, #tpu.memory_space<vmem>>, vector<128x256xf32>
      %c0_13 = arith.constant 0 : index
      %18 = memref.load %arg3[%c0_13] : memref<1xi32, #tpu.memory_space<smem>>
      %19 = tpu.iota {dimensions = array<i32: 0>} : vector<128x256xi32>
      %c128_i32 = arith.constant 128 : i32
      %20 = arith.muli %arg0, %c128_i32 : i32
      %21 = vector.broadcast %20 : i32 to vector<128x256xi32>
      %22 = arith.addi %19, %21 : vector<128x256xi32>
      %23 = tpu.iota {dimensions = array<i32: 1>} : vector<128x256xi32>
      %c256_i32 = arith.constant 256 : i32
      %24 = arith.muli %arg2, %c256_i32 : i32
      %25 = vector.broadcast %24 : i32 to vector<128x256xi32>
      %26 = arith.addi %23, %25 : vector<128x256xi32>
      %c512_i32 = arith.constant 512 : i32
      %27 = vector.broadcast %c512_i32 : i32 to vector<128x256xi32>
      %28 = arith.muli %22, %27 : vector<128x256xi32>
      %29 = arith.addi %28, %26 : vector<128x256xi32>
      %c-1640531535_i32 = arith.constant -1640531535 : i32
      %30 = vector.broadcast %c-1640531535_i32 : i32 to vector<128x256xi32>
      %31 = arith.muli %29, %30 : vector<128x256xi32>
      %32 = vector.broadcast %18 : i32 to vector<128x256xi32>
      %33 = arith.addi %31, %32 : vector<128x256xi32>
      %c16_i32 = arith.constant 16 : i32
      %34 = vector.broadcast %c16_i32 : i32 to vector<128x256xi32>
      %35 = arith.shrsi %33, %34 : vector<128x256xi32>
      %c65535_i32 = arith.constant 65535 : i32
      %36 = vector.broadcast %c65535_i32 : i32 to vector<128x256xi32>
      %37 = arith.andi %35, %36 : vector<128x256xi32>
      %38 = arith.xori %33, %37 : vector<128x256xi32>
      %c-2048144789_i32 = arith.constant -2048144789 : i32
      %39 = vector.broadcast %c-2048144789_i32 : i32 to vector<128x256xi32>
      %40 = arith.muli %38, %39 : vector<128x256xi32>
      %c13_i32 = arith.constant 13 : i32
      %41 = vector.broadcast %c13_i32 : i32 to vector<128x256xi32>
      %42 = arith.shrsi %40, %41 : vector<128x256xi32>
      %c524287_i32 = arith.constant 524287 : i32
      %43 = vector.broadcast %c524287_i32 : i32 to vector<128x256xi32>
      %44 = arith.andi %42, %43 : vector<128x256xi32>
      %45 = arith.xori %40, %44 : vector<128x256xi32>
      %c-1028477387_i32 = arith.constant -1028477387 : i32
      %46 = vector.broadcast %c-1028477387_i32 : i32 to vector<128x256xi32>
      %47 = arith.muli %45, %46 : vector<128x256xi32>
      %c16_i32_14 = arith.constant 16 : i32
      %48 = vector.broadcast %c16_i32_14 : i32 to vector<128x256xi32>
      %49 = arith.shrsi %47, %48 : vector<128x256xi32>
      %c65535_i32_15 = arith.constant 65535 : i32
      %50 = vector.broadcast %c65535_i32_15 : i32 to vector<128x256xi32>
      %51 = arith.andi %49, %50 : vector<128x256xi32>
      %52 = arith.xori %47, %51 : vector<128x256xi32>
      %c65535_i32_16 = arith.constant 65535 : i32
      %53 = vector.broadcast %c65535_i32_16 : i32 to vector<128x256xi32>
      %54 = arith.andi %52, %53 : vector<128x256xi32>
      %c16_i32_17 = arith.constant 16 : i32
      %55 = vector.broadcast %c16_i32_17 : i32 to vector<128x256xi32>
      %56 = arith.shrsi %52, %55 : vector<128x256xi32>
      %c65535_i32_18 = arith.constant 65535 : i32
      %57 = vector.broadcast %c65535_i32_18 : i32 to vector<128x256xi32>
      %58 = arith.andi %56, %57 : vector<128x256xi32>
      %c19661_i32 = arith.constant 19661 : i32
      %59 = vector.broadcast %c19661_i32 : i32 to vector<128x256xi32>
      %60 = arith.cmpi sge, %54, %59 : vector<128x256xi32>
      %c19661_i32_19 = arith.constant 19661 : i32
      %61 = vector.broadcast %c19661_i32_19 : i32 to vector<128x256xi32>
      %62 = arith.cmpi sge, %58, %61 : vector<128x256xi32>
      %cst_20 = arith.constant 0.000000e+00 : f32
      %63 = vector.broadcast %cst_20 : f32 to vector<128x256xf32>
      %64 = arith.select %60, %17, %63 : vector<128x256xi1>, vector<128x256xf32>
      %65 = arith.select %62, %17, %63 : vector<128x256xi1>, vector<128x256xf32>
      %66 = arith.subf %65, %64 : vector<128x256xf32>
      %67 = tpu.concatenate %64, %66 in 0 : vector<128x256xf32>, vector<128x256xf32> -> vector<256x256xf32>
      %68 = arith.index_cast %arg2 : i32 to index
      %c0_21 = arith.constant 0 : index
      %c0_22 = arith.constant 0 : index
      %69 = vector.load %arg10[%68, %c0_21, %c0_22] : memref<2x256x256xf32, #tpu.memory_space<vmem>>, vector<1x256x256xf32>
      %70 = vector.shape_cast %69 : vector<1x256x256xf32> to vector<256x256xf32>
      %71 = vector.shape_cast %67 : vector<256x256xf32> to vector<1x256x256xf32>
      tpu.vector_store %arg10[%68, %c0_21, %c0_22], %71 {strides = array<i32>} : memref<2x256x256xf32, #tpu.memory_space<vmem>>, vector<1x256x256xf32>,
    } else {
    }
    %c0 = arith.constant 0 : index
    %c0_3 = arith.constant 0 : index
    %6 = vector.load %arg9[%c0, %c0_3] : memref<256x256xf32, #tpu.memory_space<vmem>>, vector<256x256xf32>
    %7 = arith.index_cast %arg2 : i32 to index
    %c0_4 = arith.constant 0 : index
    %c0_5 = arith.constant 0 : index
    %8 = vector.load %arg10[%7, %c0_4, %c0_5] : memref<2x256x256xf32, #tpu.memory_space<vmem>>, vector<1x256x256xf32>
    %9 = vector.shape_cast %8 : vector<1x256x256xf32> to vector<256x256xf32>
    %c0_6 = arith.constant 0 : index
    %c0_7 = arith.constant 0 : index
    %10 = vector.load %arg5[%c0_6, %c0_7] : memref<256x256xf32, #tpu.memory_space<vmem>>, vector<256x256xf32>
    %cst = arith.constant dense<0.000000e+00> : vector<256x256xf32>
    %11 = tpu.matmul %9, %10, %cst {dimension_numbers = #tpu.dot_dimension_numbers<[1], [0], [0], [1], [0, 0, 1, 1], [], []>} : vector<256x256xf32>, vector<256x256xf32>, vector<256x256xf32> -> vector<256x256xf32>
    %12 = arith.addf %6, %11 : vector<256x256xf32>
    %c0_8 = arith.constant 0 : index
    %c0_9 = arith.constant 0 : index
    %13 = vector.load %arg9[%c0_8, %c0_9] : memref<256x256xf32, #tpu.memory_space<vmem>>, vector<256x256xf32>
    tpu.vector_store %arg9[%c0_8, %c0_9], %12 {strides = array<i32>} : memref<256x256xf32, #tpu.memory_space<vmem>>, vector<256x256xf32>,
    %c1_i32 = arith.constant 1 : i32
    %14 = arith.cmpi eq, %arg2, %c1_i32 : i32
    %15 = arith.extui %14 : i1 to i32
    %c0_i32_10 = arith.constant 0 : i32
    %16 = arith.cmpi ne, %15, %c0_i32_10 : i32
    scf.if %16 {
      %c0_11 = arith.constant 0 : index
      %c0_12 = arith.constant 0 : index
      %17 = vector.load %arg9[%c0_11, %c0_12] : memref<256x256xf32, #tpu.memory_space<vmem>>, vector<256x256xf32>
      %cst_13 = arith.constant 1.42857146 : f32
      %18 = vector.broadcast %cst_13 : f32 to vector<256x256xf32>
      %19 = arith.mulf %17, %18 : vector<256x256xf32>
      %20 = vector.extract_strided_slice %19 {offsets = [0, 0], sizes = [128, 256], strides = [1, 1]} : vector<256x256xf32> to vector<128x256xf32>
      %c0_14 = arith.constant 0 : index
      %c0_15 = arith.constant 0 : index
      %21 = vector.load %arg6[%c0_14, %c0_15] : memref<1x256xf32, #tpu.memory_space<vmem>>, vector<1x256xf32>
      %22 = vector.broadcast %21 : vector<1x256xf32> to vector<128x256xf32>
      %23 = arith.addf %20, %22 : vector<128x256xf32>
      %24 = vector.extract_strided_slice %19 {offsets = [128, 0], sizes = [128, 256], strides = [1, 1]} : vector<256x256xf32> to vector<128x256xf32>
      %c0_16 = arith.constant 0 : index
      %c0_17 = arith.constant 0 : index
      %25 = vector.load %arg7[%c0_16, %c0_17] : memref<128x256xf32, #tpu.memory_space<vmem>>, vector<128x256xf32>
      tpu.vector_store %arg7[%c0_16, %c0_17], %23 {strides = array<i32>} : memref<128x256xf32, #tpu.memory_space<vmem>>, vector<128x256xf32>,
      %26 = arith.mulf %24, %24 : vector<128x256xf32>
      %27 = vector.shape_cast %26 : vector<128x256xf32> to vector<1x128x256xf32>
      %cst_18 = arith.constant dense<0.000000e+00> : vector<1xf32>
      %28 = vector.multi_reduction <add>, %27, %cst_18 [1, 2] : vector<1x128x256xf32> to vector<1xf32>
      %29 = vector.shape_cast %28 : vector<1xf32> to vector<1x1x1xf32>
      %30 = vector.extract %29[0, 0, 0] : f32 from vector<1x1x1xf32>
      %31 = vector.broadcast %30 : f32 to vector<8x128xf32>
      %c0_19 = arith.constant 0 : index
      %c0_20 = arith.constant 0 : index
      %32 = vector.load %arg8[%c0_19, %c0_20] : memref<8x128xf32, #tpu.memory_space<vmem>>, vector<8x128xf32>
      tpu.vector_store %arg8[%c0_19, %c0_20], %31 {strides = array<i32>} : memref<8x128xf32, #tpu.memory_space<vmem>>, vector<8x128xf32>,
    } else {
    }
    return
  }
  func.func @transform_0(%arg0: i32, %arg1: i32, %arg2: i32, %arg3: memref<1xi32, #tpu.memory_space<smem>>) -> (i32, i32) {
    %c0_i32 = arith.constant 0 : i32
    return %arg0, %arg2 : i32, i32
  }
  func.func @transform_1(%arg0: i32, %arg1: i32, %arg2: i32, %arg3: memref<1xi32, #tpu.memory_space<smem>>) -> (i32, i32) {
    %c0_i32 = arith.constant 0 : i32
    return %arg2, %arg1 : i32, i32
  }
  func.func @transform_2(%arg0: i32, %arg1: i32, %arg2: i32, %arg3: memref<1xi32, #tpu.memory_space<smem>>) -> (i32, i32) {
    %c0_i32 = arith.constant 0 : i32
    %c0_i32_0 = arith.constant 0 : i32
    return %c0_i32, %arg1 : i32, i32
  }
  func.func @transform_3(%arg0: i32, %arg1: i32, %arg2: i32, %arg3: memref<1xi32, #tpu.memory_space<smem>>) -> (i32, i32) {
    %c0_i32 = arith.constant 0 : i32
    return %arg0, %arg1 : i32, i32
  }
  func.func @transform_4(%arg0: i32, %arg1: i32, %arg2: i32, %arg3: memref<1xi32, #tpu.memory_space<smem>>) -> (i32, i32) {
    %c0_i32 = arith.constant 0 : i32
    return %arg0, %arg1 : i32, i32
  }
}

</mosaic_0001>

<llo_original>
// kernel: tpu_custom_call.1
$region0: #{tpu_custom_call.1}
  #allocation0 [shape = 'u32[]', space=smem, size = 0x4, offset = 0x4, fixed_abs, tag = 'smem constant byte address 0x4 - core index']
  #allocation1 [shape = 'u32[144,128]{1,0:T(1,128)}', space=vmem, size = 0x12000, scoped, tag = 'internal scratch']
  #allocation2 [shape = 'f32[256,256]{1,0:T(8,128)}', space=vmem, size = 0x40000, scoped, tag = 'scratch operand']
  #allocation3 [shape = 'f32[2,256,256]{2,1,0:T(8,128)}', space=vmem, size = 0x80000, scoped, tag = 'scratch operand']
  #allocation4 [shape = 's32[1]{0}', space=sflag, size = 0x4, scoped, tag = 'scoped memory for tpu_custom_call.1']
  #allocation5 [shape = 's32[1]{0:T(128)S(6)}', space=smem, size = 0x200, scoped, tag = 'prefetched SMEM operand 0']
  %s0 = inlined_call_operand.<no memory space> [shape: s32[1], index: 0, kind: input, shape index: {}]
  %s1 = inlined_call_operand.hbm [shape: f32[256,512], index: 1, kind: input, shape index: {}]
  %s2 = inlined_call_operand.hbm [shape: f32[512,512], index: 2, kind: input, shape index: {}]
  %s3 = inlined_call_operand.vmem [shape: f32[1,512], index: 3, kind: input, shape index: {}]
  %s4 = inlined_call_operand.hbm [shape: f32[256,512], index: 4, kind: output, shape index: {0}]
  %s5 = inlined_call_operand.hbm [shape: f32[16,256], index: 5, kind: output, shape index: {1}]
  %6 = xla_tuple %s4, %s5
  %s7 = sld [smem:[#allocation0]]
  $region73: #{tpu_custom_call.1} parent=0
    _
  %s9 = ssub.s32 1, %s7
  %s10 = scalar_select 0, %s9, %s7
  %11 = sst [smem:[#allocation5]] %s0
  $region1: #{tpu_custom_call.1} parent=0
    #allocation6 [shape = 'u8[262144]{0}', space=vmem, size = 0x40000, scoped, tag = 'input window, operand 1']
    #allocation7 [shape = 's32[2]{0}', space=sflag, size = 0x8, scoped, tag = 'scoped memory for tpu_custom_call.1']
    #allocation8 [shape = 's32[2]{0}', space=sflag, size = 0x8, scoped, tag = 'scoped memory for tpu_custom_call.1']
    #allocation9 [shape = 'u8[524288]{0}', space=vmem, size = 0x80000, scoped, tag = 'input window, operand 2']
    #allocation10 [shape = 's32[2]{0}', space=sflag, size = 0x8, scoped, tag = 'scoped memory for tpu_custom_call.1']
    #allocation11 [shape = 'u8[262144]{0}', space=vmem, size = 0x40000, scoped, tag = 'output window, operand 0']
    #allocation12 [shape = 'u8[8192]{0}', space=vmem, size = 0x2000, scoped, tag = 'output window, operand 1']
    #allocation13 [shape = 's32[2]{0}', space=sflag, size = 0x8, scoped, tag = 'scoped memory for tpu_custom_call.1']
    %12 = vsyncpa [#allocation7], 0
    %s13 = scalar_lea.sflag [#allocation7], 1
    %14 = vsyncpa %s13, 0
    %15 = vsyncpa [#allocation10], 0
    %s16 = scalar_lea.sflag [#allocation10], 1
    %17 = vsyncpa %s16, 0
    %18 = vsyncpa [#allocation8], 0
    %s19 = scalar_lea.sflag [#allocation8], 1
    %20 = vsyncpa %s19, 0
    %21 = vsyncpa [#allocation13], 0
    %s22 = scalar_lea.sflag [#allocation13], 1
    %23 = vsyncpa %s22, 0
    loop: start=0, step=1, limit=10
    $region2: #{tpu_custom_call.1} parent=1 // loop_pre_header
      _
    $region3: #{tpu_custom_call.1} parent=1 // loop_header
      %s25 = sphi 0, %s29
      %p26 = scmp.ge.s32.totalorder %s25, 10
      %s32 = sphi 0, %s51
      %s33 = sphi 0, %s47
      %s34 = sphi 0, %s43
      %s35 = sphi 0, %s32
      %s36 = sphi 0, %s33
      %s37 = sphi 0, %s34
      %s38 = sphi 0, %s35
      %s39 = sphi 0, %s36
      %s40 = sphi 0, %s37
      %s56 = sphi 0, %s58
      %s59 = sphi 0, %s56
      %s60 = sphi 0, %s59
      %s76 = sphi 0, %s60
      %s84 = sphi 0, %s86
      %s87 = sphi 0, %s84
      %s88 = sphi 0, %s87
      %s104 = sphi 0, %s88
      %s110 = sphi 0, %s112
      %s113 = sphi 0, %s110
      %s114 = sphi 0, %s113
      %s130 = sphi 0, %s114
      %s138 = sphi 0, %s140
      %s141 = sphi 0, %s138
      %s142 = sphi 0, %s141
      %s158 = sphi 0, %s142
      %s166 = sphi 0, %s168
      %s169 = sphi 0, %s166
      %s170 = sphi 0, %s169
      %s186 = sphi 0, %s170
    $region4: #{tpu_custom_call.1} parent=1 // loop_header_branch
      %28 = sbr.rel (%p26) target = $region8
    $region5: #{tpu_custom_call.1} parent=1 // loop_body
      %s30 = ssub.s32 %s25, 1
      %s31 = ssub.s32 %s25, 2
      %s41 = sadd.s32 1, %s34
      %p42 = scmp.ge.s32.totalorder %s41, 2
      %s43 = scalar_select %p42, 0, %s41
      %s44 = sadd.s32 1, %s33
      %s45 = scalar_select %p42, %s44, %s33
      %p46 = scmp.ge.s32.totalorder %s45, 2
      %s47 = scalar_select %p46, 0, %s45
      %s48 = sadd.s32 1, %s32
      %s49 = scalar_select %p46, %s48, %s32
      %p50 = scmp.ge.s32.totalorder %s49, 2
      %s51 = scalar_select %p50, 0, %s49
      %s52 = ssub.s32 %s32, %s51
      %s53 = ssub.s32 %s34, %s43
      %s54 = sor.u32 %s52, %s53
      %p55 = scmp.eq.s32.totalorder %s54, 0
      %s57 = sadd.s32 %s56, 1
      %s58 = scalar_select %p55, %s56, %s57
      %p61 = pneg %p55
      %p62 = scmp.eq.s32.totalorder %s25, 7
      %p63 = por %p61, %p62
      %p64 = scmp.ne.s32.totalorder %s56, %s59
      %p65 = scmp.eq.s32.totalorder %s25, 0
      %p66 = por %p64, %p65
      %p67 = scmp.ne.s32.totalorder %s56, %s59
      %p68 = scmp.eq.s32.totalorder %s30, 7
      %p69 = por %p67, %p68
      %p70 = scmp.ne.s32.totalorder %s59, %s60
      %p71 = scmp.eq.s32.totalorder %s30, 0
      %p72 = por %p70, %p71
      %p73 = scmp.ne.s32.totalorder %s59, %s60
      %p74 = scmp.eq.s32.totalorder %s31, 7
      %p75 = por %p73, %p74
      %p77 = scmp.ne.s32.totalorder %s60, %s76
      %p78 = scmp.eq.s32.totalorder %s31, 0
      %p79 = por %p77, %p78
      %s80 = ssub.s32 %s34, %s43
      %s81 = ssub.s32 %s33, %s47
      %s82 = sor.u32 %s80, %s81
      %p83 = scmp.eq.s32.totalorder %s82, 0
      %s85 = sadd.s32 %s84, 1
      %s86 = scalar_select %p83, %s84, %s85
      %p89 = pneg %p83
      %p90 = scmp.eq.s32.totalorder %s25, 7
      %p91 = por %p89, %p90
      %p92 = scmp.ne.s32.totalorder %s84, %s87
      %p93 = scmp.eq.s32.totalorder %s25, 0
      %p94 = por %p92, %p93
      %p95 = scmp.ne.s32.totalorder %s84, %s87
      %p96 = scmp.eq.s32.totalorder %s30, 7
      %p97 = por %p95, %p96
      %p98 = scmp.ne.s32.totalorder %s87, %s88
      %p99 = scmp.eq.s32.totalorder %s30, 0
      %p100 = por %p98, %p99
      %p101 = scmp.ne.s32.totalorder %s87, %s88
      %p102 = scmp.eq.s32.totalorder %s31, 7
      %p103 = por %p101, %p102
      %p105 = scmp.ne.s32.totalorder %s88, %s104
      %p106 = scmp.eq.s32.totalorder %s31, 0
      %p107 = por %p105, %p106
      %s108 = ssub.s32 %s33, %s47
      %p109 = scmp.eq.s32.totalorder %s108, 0
      %s111 = sadd.s32 %s110, 1
      %s112 = scalar_select %p109, %s110, %s111
      %p115 = pneg %p109
      %p116 = scmp.eq.s32.totalorder %s25, 7
      %p117 = por %p115, %p116
      %p118 = scmp.ne.s32.totalorder %s110, %s113
      %p119 = scmp.eq.s32.totalorder %s25, 0
      %p120 = por %p118, %p119
      %p121 = scmp.ne.s32.totalorder %s110, %s113
      %p122 = scmp.eq.s32.totalorder %s30, 7
      %p123 = por %p121, %p122
      %p124 = scmp.ne.s32.totalorder %s113, %s114
      %p125 = scmp.eq.s32.totalorder %s30, 0
      %p126 = por %p124, %p125
      %p127 = scmp.ne.s32.totalorder %s113, %s114
      %p128 = scmp.eq.s32.totalorder %s31, 7
      %p129 = por %p127, %p128
      %p131 = scmp.ne.s32.totalorder %s114, %s130
      %p132 = scmp.eq.s32.totalorder %s31, 0
      %p133 = por %p131, %p132
      %s134 = ssub.s32 %s32, %s51
      %s135 = ssub.s32 %s33, %s47
      %s136 = sor.u32 %s134, %s135
      %p137 = scmp.eq.s32.totalorder %s136, 0
      %s139 = sadd.s32 %s138, 1
      %s140 = scalar_select %p137, %s138, %s139
      %p143 = pneg %p137
      %p144 = scmp.eq.s32.totalorder %s25, 7
      %p145 = por %p143, %p144
      %p146 = scmp.ne.s32.totalorder %s138, %s141
      %p147 = scmp.eq.s32.totalorder %s25, 0
      %p148 = por %p146, %p147
      %p149 = scmp.ne.s32.totalorder %s138, %s141
      %p150 = scmp.eq.s32.totalorder %s30, 7
      %p151 = por %p149, %p150
      %p152 = scmp.ne.s32.totalorder %s141, %s142
      %p153 = scmp.eq.s32.totalorder %s30, 0
      %p154 = por %p152, %p153
      %p155 = scmp.ne.s32.totalorder %s141, %s142
      %p156 = scmp.eq.s32.totalorder %s31, 7
      %p157 = por %p155, %p156
      %p159 = scmp.ne.s32.totalorder %s142, %s158
      %p160 = scmp.eq.s32.totalorder %s31, 0
      %p161 = por %p159, %p160
      %s162 = ssub.s32 %s32, %s51
      %s163 = ssub.s32 %s33, %s47
      %s164 = sor.u32 %s162, %s163
      %p165 = scmp.eq.s32.totalorder %s164, 0
      %s167 = sadd.s32 %s166, 1
      %s168 = scalar_select %p165, %s166, %s167
      %p171 = pneg %p165
      %p172 = scmp.eq.s32.totalorder %s25, 7
      %p173 = por %p171, %p172
      %p174 = scmp.ne.s32.totalorder %s166, %s169
      %p175 = scmp.eq.s32.totalorder %s25, 0
      %p176 = por %p174, %p175
      %p177 = scmp.ne.s32.totalorder %s166, %s169
      %p178 = scmp.eq.s32.totalorder %s30, 7
      %p179 = por %p177, %p178
      %p180 = scmp.ne.s32.totalorder %s169, %s170
      %p181 = scmp.eq.s32.totalorder %s30, 0
      %p182 = por %p180, %p181
      %p183 = scmp.ne.s32.totalorder %s169, %s170
      %p184 = scmp.eq.s32.totalorder %s31, 7
      %p185 = por %p183, %p184
      %p187 = scmp.ne.s32.totalorder %s170, %s186
      %p188 = scmp.eq.s32.totalorder %s31, 0
      %p189 = por %p187, %p188
      %p190 = scmp.le.s32.totalorder 1, %s25
      %p191 = scmp.lt.s32.totalorder %s25, 9
      %p192 = pnand %p190, %p191
      %p193 = pneg %p192
      // Predicated region
      $region9: #{tpu_custom_call.1} parent=5 // pred_check
        _
      $region10: #{tpu_custom_call.1} parent=5 // pred_check_branch
        %195 = sbr.rel (%p192) target = $region12
      $region11: #{tpu_custom_call.1} parent=5 // pred_region
        %s196 = ssub.s32 %s25, 1
      $region12: #{tpu_custom_call.1} parent=5 // pred_fallthru
        _
      %p197 = scmp.lt.s32.totalorder %s25, 8
      // Predicated region
      $region13: #{tpu_custom_call.1} parent=5 // pred_check
        %p198 = pneg %p197
      $region14: #{tpu_custom_call.1} parent=5 // pred_check_branch
        %200 = sbr.rel (%p198) target = $region16
      $region15: #{tpu_custom_call.1} parent=5 // pred_region
        // Predicated region
        $region17: #{tpu_custom_call.1} parent=15 // pred_check
          %p201 = pneg %p66
        $region18: #{tpu_custom_call.1} parent=15 // pred_check_branch
          %203 = sbr.rel (%p201) target = $region20
        $region19: #{tpu_custom_call.1} parent=15 // pred_region
          %s204 = sand.u32 %s56, 1
          %s205 = scalar_lea.sflag [#allocation7], %s204
          %s206 = sand.u32 %s56, 1
          %s207 = smul.addr %s206, 256
          %s208 = scalar_lea.vmem [#allocation6], %s207
          %s209 = smul.u32 16, %s32
          %s210 = smul.u32 2, %s34
          %s212 = ssub.s32 4096, 4096
          %213 = vsyncadd %s205, %s212
          %s214 = smul.addr %s209, 4
          %s215 = sadd.s32 %s210, %s214
          %s216 = smul.addr %s215, 128
          %s217 = scalar_lea.hbm %s1, %s216
          %s218 = sshll.u32 %s208, 4
          %s219 = int_to_ptr.vmem [resolvable:$true] %s218
          %224 = dma.hbm_to_vmem [thread:$0]  %s217, 4096, %s219, %s205, 512, 256, 16
        $region20: #{tpu_custom_call.1} parent=15 // pred_fallthru
          _
        // Predicated region
        $region21: #{tpu_custom_call.1} parent=15 // pred_check
          %p225 = pneg %p94
        $region22: #{tpu_custom_call.1} parent=15 // pred_check_branch
          %227 = sbr.rel (%p225) target = $region24
        $region23: #{tpu_custom_call.1} parent=15 // pred_region
          %s228 = sand.u32 %s84, 1
          %s229 = scalar_lea.sflag [#allocation10], %s228
          %s230 = sand.u32 %s84, 1
          %s231 = smul.addr %s230, 512
          %s232 = scalar_lea.vmem [#allocation9], %s231
          %s233 = smul.u32 32, %s34
          %s234 = smul.u32 2, %s33
          %s236 = ssub.s32 8192, 8192
          %237 = vsyncadd %s229, %s236
          %s238 = smul.addr %s233, 4
          %s239 = sadd.s32 %s234, %s238
          %s240 = smul.addr %s239, 128
          %s241 = scalar_lea.hbm %s2, %s240
          %s242 = sshll.u32 %s232, 4
          %s243 = int_to_ptr.vmem [resolvable:$true] %s242
          %248 = dma.hbm_to_vmem [thread:$0]  %s241, 8192, %s243, %s229, 512, 256, 16
        $region24: #{tpu_custom_call.1} parent=15 // pred_fallthru
          _
        // Predicated region
        $region25: #{tpu_custom_call.1} parent=15 // pred_check
          %p249 = pneg %p120
        $region26: #{tpu_custom_call.1} parent=15 // pred_check_branch
          %251 = sbr.rel (%p249) target = $region28
        $region27: #{tpu_custom_call.1} parent=15 // pred_region
          %s252 = smul.u32 2, %s33
          %p253 = scmp.lt.s32.totalorder %s252, 3
          %s254 = scalar_select %p253, %s252, 3
          %s255 = scalar_lea.vmem %s3, %s254
          %s256 = smul.u32 2, %s33
        $region28: #{tpu_custom_call.1} parent=15 // pred_fallthru
          _
      $region16: #{tpu_custom_call.1} parent=5 // pred_fallthru
        _
      %p257 = scmp.le.s32.totalorder 1, %s25
      %p258 = scmp.lt.s32.totalorder %s25, 9
      %p259 = pnand %p257, %p258
      %p260 = pneg %p259
      // Predicated region
      $region29: #{tpu_custom_call.1} parent=5 // pred_check
        _
      $region30: #{tpu_custom_call.1} parent=5 // pred_check_branch
        %262 = sbr.rel (%p259) target = $region32
      $region31: #{tpu_custom_call.1} parent=5 // pred_region
        %s263 = ssub.s32 %s25, 1
        %s264 = sand.u32 %s59, 1
        %s265 = scalar_lea.sflag [#allocation7], %s264
        %s266 = sand.u32 %s59, 1
        %s267 = smul.addr %s266, 256
        %s268 = scalar_lea.vmem [#allocation6], %s267
        // Predicated region
        $region33: #{tpu_custom_call.1} parent=31 // pred_check
          %p269 = pneg %p72
        $region34: #{tpu_custom_call.1} parent=31 // pred_check_branch
          %271 = sbr.rel (%p269) target = $region36
        $region35: #{tpu_custom_call.1} parent=31 // pred_region
          %272 = dma.done %s265, 4096
        $region36: #{tpu_custom_call.1} parent=31 // pred_fallthru
          _
        %s273 = sand.u32 %s87, 1
        %s274 = scalar_lea.sflag [#allocation10], %s273
        %s275 = sand.u32 %s87, 1
        %s276 = smul.addr %s275, 512
        %s277 = scalar_lea.vmem [#allocation9], %s276
        // Predicated region
        $region37: #{tpu_custom_call.1} parent=31 // pred_check
          %p278 = pneg %p100
        $region38: #{tpu_custom_call.1} parent=31 // pred_check_branch
          %280 = sbr.rel (%p278) target = $region40
        $region39: #{tpu_custom_call.1} parent=31 // pred_region
          %281 = dma.done %s274, 8192
        $region40: #{tpu_custom_call.1} parent=31 // pred_fallthru
          _
        %s282 = sand.u32 %s59, 1
        %s283 = scalar_lea.sflag [#allocation7], %s282
        %s284 = sand.u32 %s59, 1
        %s285 = smul.addr %s284, 256
        %s286 = scalar_lea.vmem [#allocation6], %s285
        %p287 = pneg %p72
        %p288 = pneg %p69
        %s289 = sand.u32 %s87, 1
        %s290 = scalar_lea.sflag [#allocation10], %s289
        %s291 = sand.u32 %s87, 1
        %s292 = smul.addr %s291, 512
        %s293 = scalar_lea.vmem [#allocation9], %s292
        %p294 = pneg %p100
        %p295 = pneg %p97
        %s296 = smul.u32 2, %s36
        %p297 = scmp.lt.s32.totalorder %s296, 3
        %s298 = scalar_select %p297, %s296, 3
        %s299 = scalar_lea.vmem %s3, %s298
        %p300 = pneg %p126
        %p301 = pneg %p123
        %p302 = pneg %p154
        %p303 = pneg %p151
        %s304 = sand.u32 %s141, 1
        %s305 = scalar_lea.sflag [#allocation8], %s304
        %s306 = sand.u32 %s141, 1
        %s307 = smul.addr %s306, 256
        %s308 = scalar_lea.vmem [#allocation11], %s307
        %p309 = pneg %p182
        %p310 = pneg %p179
        %s311 = sand.u32 %s169, 1
        %s312 = scalar_lea.sflag [#allocation13], %s311
        %s313 = sand.u32 %s169, 1
        %s314 = smul.addr %s313, 8
        %s315 = scalar_lea.vmem [#allocation12], %s314
        %s316 = smul.u32 16, %s35
        %s317 = smul.u32 2, %s37
        %s318 = smul.u32 32, %s37
        %s319 = smul.u32 2, %s36
        %s320 = smul.u32 2, %s36
        %p321 = scmp.lt.s32.totalorder %s320, 3
        %s322 = scalar_select %p321, %s320, 3
        %s323 = scalar_lea.vmem %s3, %s322
        %s324 = smul.u32 2, %s36
        %s325 = smul.u32 16, %s35
        %s326 = smul.u32 2, %s36
        %p327 = scmp.eq.s32.totalorder %s37, 0
        // Predicated region
        $region41: #{tpu_custom_call.1} parent=31 // pred_check
          %p328 = pneg %p327
        $region42: #{tpu_custom_call.1} parent=31 // pred_check_branch
          %330 = sbr.rel (%p328) target = $region44
        $region43: #{tpu_custom_call.1} parent=31 // pred_region
          %331 = vst [vmem:[#allocation2] sm:$0xff] 0.0
          %332 = vst [vmem:[#allocation2 + $0x8] sm:$0xff] 0.0
          %333 = vst [vmem:[#allocation2 + $0x10] sm:$0xff] 0.0
          %334 = vst [vmem:[#allocation2 + $0x18] sm:$0xff] 0.0
          %335 = vst [vmem:[#allocation2 + $0x20] sm:$0xff] 0.0
          %336 = vst [vmem:[#allocation2 + $0x28] sm:$0xff] 0.0
          %337 = vst [vmem:[#allocation2 + $0x30] sm:$0xff] 0.0
          %338 = vst [vmem:[#allocation2 + $0x38] sm:$0xff] 0.0
          %339 = vst [vmem:[#allocation2 + $0x40] sm:$0xff] 0.0
          %340 = vst [vmem:[#allocation2 + $0x48] sm:$0xff] 0.0
          %341 = vst [vmem:[#allocation2 + $0x50] sm:$0xff] 0.0
          %342 = vst [vmem:[#allocation2 + $0x58] sm:$0xff] 0.0
          %343 = vst [vmem:[#allocation2 + $0x60] sm:$0xff] 0.0
          %344 = vst [vmem:[#allocation2 + $0x68] sm:$0xff] 0.0
          %345 = vst [vmem:[#allocation2 + $0x70] sm:$0xff] 0.0
          %346 = vst [vmem:[#allocation2 + $0x78] sm:$0xff] 0.0
          %347 = vst [vmem:[#allocation2 + $0x80] sm:$0xff] 0.0
          %348 = vst [vmem:[#allocation2 + $0x88] sm:$0xff] 0.0
          %349 = vst [vmem:[#allocation2 + $0x90] sm:$0xff] 0.0
          %350 = vst [vmem:[#allocation2 + $0x98] sm:$0xff] 0.0
          %351 = vst [vmem:[#allocation2 + $0xa0] sm:$0xff] 0.0
          %352 = vst [vmem:[#allocation2 + $0xa8] sm:$0xff] 0.0
          %353 = vst [vmem:[#allocation2 + $0xb0] sm:$0xff] 0.0
          %354 = vst [vmem:[#allocation2 + $0xb8] sm:$0xff] 0.0
          %355 = vst [vmem:[#allocation2 + $0xc0] sm:$0xff] 0.0
          %356 = vst [vmem:[#allocation2 + $0xc8] sm:$0xff] 0.0
          %357 = vst [vmem:[#allocation2 + $0xd0] sm:$0xff] 0.0
          %358 = vst [vmem:[#allocation2 + $0xd8] sm:$0xff] 0.0
          %359 = vst [vmem:[#allocation2 + $0xe0] sm:$0xff] 0.0
          %360 = vst [vmem:[#allocation2 + $0xe8] sm:$0xff] 0.0
          %361 = vst [vmem:[#allocation2 + $0xf0] sm:$0xff] 0.0
          %362 = vst [vmem:[#allocation2 + $0xf8] sm:$0xff] 0.0
          %363 = vst [vmem:[#allocation2 + $0x100] sm:$0xff] 0.0
          %364 = vst [vmem:[#allocation2 + $0x108] sm:$0xff] 0.0
          %365 = vst [vmem:[#allocation2 + $0x110] sm:$0xff] 0.0
          %366 = vst [vmem:[#allocation2 + $0x118] sm:$0xff] 0.0
          %367 = vst [vmem:[#allocation2 + $0x120] sm:$0xff] 0.0
          %368 = vst [vmem:[#allocation2 + $0x128] sm:$0xff] 0.0
          %369 = vst [vmem:[#allocation2 + $0x130] sm:$0xff] 0.0
          %370 = vst [vmem:[#allocation2 + $0x138] sm:$0xff] 0.0
          %371 = vst [vmem:[#allocation2 + $0x140] sm:$0xff] 0.0
          %372 = vst [vmem:[#allocation2 + $0x148] sm:$0xff] 0.0
          %373 = vst [vmem:[#allocation2 + $0x150] sm:$0xff] 0.0
          %374 = vst [vmem:[#allocation2 + $0x158] sm:$0xff] 0.0
          %375 = vst [vmem:[#allocation2 + $0x160] sm:$0xff] 0.0
          %376 = vst [vmem:[#allocation2 + $0x168] sm:$0xff] 0.0
          %377 = vst [vmem:[#allocation2 + $0x170] sm:$0xff] 0.0
          %378 = vst [vmem:[#allocation2 + $0x178] sm:$0xff] 0.0
          %379 = vst [vmem:[#allocation2 + $0x180] sm:$0xff] 0.0
          %380 = vst [vmem:[#allocation2 + $0x188] sm:$0xff] 0.0
          %381 = vst [vmem:[#allocation2 + $0x190] sm:$0xff] 0.0
          %382 = vst [vmem:[#allocation2 + $0x198] sm:$0xff] 0.0
          %383 = vst [vmem:[#allocation2 + $0x1a0] sm:$0xff] 0.0
          %384 = vst [vmem:[#allocation2 + $0x1a8] sm:$0xff] 0.0
          %385 = vst [vmem:[#allocation2 + $0x1b0] sm:$0xff] 0.0
          %386 = vst [vmem:[#allocation2 + $0x1b8] sm:$0xff] 0.0
          %387 = vst [vmem:[#allocation2 + $0x1c0] sm:$0xff] 0.0
          %388 = vst [vmem:[#allocation2 + $0x1c8] sm:$0xff] 0.0
          %389 = vst [vmem:[#allocation2 + $0x1d0] sm:$0xff] 0.0
          %390 = vst [vmem:[#allocation2 + $0x1d8] sm:$0xff] 0.0
          %391 = vst [vmem:[#allocation2 + $0x1e0] sm:$0xff] 0.0
          %392 = vst [vmem:[#allocation2 + $0x1e8] sm:$0xff] 0.0
          %393 = vst [vmem:[#allocation2 + $0x1f0] sm:$0xff] 0.0
          %394 = vst [vmem:[#allocation2 + $0x1f8] sm:$0xff] 0.0
        $region44: #{tpu_custom_call.1} parent=31 // pred_fallthru
          _
        %p395 = scmp.eq.s32.totalorder %s36, 0
        // Predicated region
        $region45: #{tpu_custom_call.1} parent=31 // pred_check
          %p396 = pneg %p395
        $region46: #{tpu_custom_call.1} parent=31 // pred_check_branch
          %398 = sbr.rel (%p396) target = $region48
        $region47: #{tpu_custom_call.1} parent=31 // pred_region
          %v399 = vld [vmem:[%s268] sm:$0xff]
          %v400 = vld [vmem:[%s268 + $0x8] sm:$0xff]
          %v401 = vld [vmem:[%s268 + $0x10] sm:$0xff]
          %v402 = vld [vmem:[%s268 + $0x18] sm:$0xff]
          %v403 = vld [vmem:[%s268 + $0x20] sm:$0xff]
          %v404 = vld [vmem:[%s268 + $0x28] sm:$0xff]
          %v405 = vld [vmem:[%s268 + $0x30] sm:$0xff]
          %v406 = vld [vmem:[%s268 + $0x38] sm:$0xff]
          %v407 = vld [vmem:[%s268 + $0x40] sm:$0xff]
          %v408 = vld [vmem:[%s268 + $0x48] sm:$0xff]
          %v409 = vld [vmem:[%s268 + $0x50] sm:$0xff]
          %v410 = vld [vmem:[%s268 + $0x58] sm:$0xff]
          %v411 = vld [vmem:[%s268 + $0x60] sm:$0xff]
          %v412 = vld [vmem:[%s268 + $0x68] sm:$0xff]
          %v413 = vld [vmem:[%s268 + $0x70] sm:$0xff]
          %v414 = vld [vmem:[%s268 + $0x78] sm:$0xff]
          %v415 = vld [vmem:[%s268 + $0x80] sm:$0xff]
          %v416 = vld [vmem:[%s268 + $0x88] sm:$0xff]
          %v417 = vld [vmem:[%s268 + $0x90] sm:$0xff]
          %v418 = vld [vmem:[%s268 + $0x98] sm:$0xff]
          %v419 = vld [vmem:[%s268 + $0xa0] sm:$0xff]
          %v420 = vld [vmem:[%s268 + $0xa8] sm:$0xff]
          %v421 = vld [vmem:[%s268 + $0xb0] sm:$0xff]
          %v422 = vld [vmem:[%s268 + $0xb8] sm:$0xff]
          %v423 = vld [vmem:[%s268 + $0xc0] sm:$0xff]
          %v424 = vld [vmem:[%s268 + $0xc8] sm:$0xff]
          %v425 = vld [vmem:[%s268 + $0xd0] sm:$0xff]
          %v426 = vld [vmem:[%s268 + $0xd8] sm:$0xff]
          %v427 = vld [vmem:[%s268 + $0xe0] sm:$0xff]
          %v428 = vld [vmem:[%s268 + $0xe8] sm:$0xff]
          %v429 = vld [vmem:[%s268 + $0xf0] sm:$0xff]
          %v430 = vld [vmem:[%s268 + $0xf8] sm:$0xff]
          %s431 = sld [smem:[#allocation5]]
          %v432 = vlaneseq
          %v433 = vshrl.u32 %v432, 7
          %v434 = vadd.s32 %v433, 8
          %v435 = vadd.s32 %v433, 16
          %v436 = vadd.s32 %v433, 24
          %v437 = vadd.s32 %v433, 32
          %v438 = vadd.s32 %v433, 40
          %v439 = vadd.s32 %v433, 48
          %v440 = vadd.s32 %v433, 56
          %v441 = vadd.s32 %v433, 64
          %v442 = vadd.s32 %v433, 72
          %v443 = vadd.s32 %v433, 80
          %v444 = vadd.s32 %v433, 88
          %v445 = vadd.s32 %v433, 96
          %v446 = vadd.s32 %v433, 104
          %v447 = vadd.s32 %v433, 112
          %v448 = vadd.s32 %v433, 120
          %s449 = smul.u32 %s35, 128
          %v450 = vstv %s449
          %v451 = vadd.s32 %v433, %v450
          %v452 = vadd.s32 %v434, %v450
          %v453 = vadd.s32 %v435, %v450
          %v454 = vadd.s32 %v436, %v450
          %v455 = vadd.s32 %v437, %v450
          %v456 = vadd.s32 %v438, %v450
          %v457 = vadd.s32 %v439, %v450
          %v458 = vadd.s32 %v440, %v450
          %v459 = vadd.s32 %v441, %v450
          %v460 = vadd.s32 %v442, %v450
          %v461 = vadd.s32 %v443, %v450
          %v462 = vadd.s32 %v444, %v450
          %v463 = vadd.s32 %v445, %v450
          %v464 = vadd.s32 %v446, %v450
          %v465 = vadd.s32 %v447, %v450
          %v466 = vadd.s32 %v448, %v450
          %v467 = vlaneseq
          %v468 = vand.u32 %v467, 127
          %v469 = vadd.s32 %v468, 128
          %s470 = smul.u32 %s37, 256
          %v471 = vstv %s470
          %v472 = vadd.s32 %v468, %v471
          %v473 = vadd.s32 %v469, %v471
          %v474 = vmul.u32 %v451, 512
          %v475 = vmul.u32 %v452, 512
          %v476 = vmul.u32 %v453, 512
          %v477 = vmul.u32 %v454, 512
          %v478 = vmul.u32 %v455, 512
          %v479 = vmul.u32 %v456, 512
          %v480 = vmul.u32 %v457, 512
          %v481 = vmul.u32 %v458, 512
          %v482 = vmul.u32 %v459, 512
          %v483 = vmul.u32 %v460, 512
          %v484 = vmul.u32 %v461, 512
          %v485 = vmul.u32 %v462, 512
          %v486 = vmul.u32 %v463, 512
          %v487 = vmul.u32 %v464, 512
          %v488 = vmul.u32 %v465, 512
          %v489 = vmul.u32 %v466, 512
          %v490 = vadd.s32 %v474, %v472
          %v491 = vadd.s32 %v474, %v473
          %v492 = vadd.s32 %v475, %v472
          %v493 = vadd.s32 %v475, %v473
          %v494 = vadd.s32 %v476, %v472
          %v495 = vadd.s32 %v476, %v473
          %v496 = vadd.s32 %v477, %v472
          %v497 = vadd.s32 %v477, %v473
          %v498 = vadd.s32 %v478, %v472
          %v499 = vadd.s32 %v478, %v473
          %v500 = vadd.s32 %v479, %v472
          %v501 = vadd.s32 %v479, %v473
          %v502 = vadd.s32 %v480, %v472
          %v503 = vadd.s32 %v480, %v473
          %v504 = vadd.s32 %v481, %v472
          %v505 = vadd.s32 %v481, %v473
          %v506 = vadd.s32 %v482, %v472
          %v507 = vadd.s32 %v482, %v473
          %v508 = vadd.s32 %v483, %v472
          %v509 = vadd.s32 %v483, %v473
          %v510 = vadd.s32 %v484, %v472
          %v511 = vadd.s32 %v484, %v473
          %v512 = vadd.s32 %v485, %v472
          %v513 = vadd.s32 %v485, %v473
          %v514 = vadd.s32 %v486, %v472
          %v515 = vadd.s32 %v486, %v473
          %v516 = vadd.s32 %v487, %v472
          %v517 = vadd.s32 %v487, %v473
          %v518 = vadd.s32 %v488, %v472
          %v519 = vadd.s32 %v488, %v473
          %v520 = vadd.s32 %v489, %v472
          %v521 = vadd.s32 %v489, %v473
          %v522 = vmul.u32 %v490, 2654435761
          %v523 = vmul.u32 %v491, 2654435761
          %v524 = vmul.u32 %v492, 2654435761
          %v525 = vmul.u32 %v493, 2654435761
          %v526 = vmul.u32 %v494, 2654435761
          %v527 = vmul.u32 %v495, 2654435761
          %v528 = vmul.u32 %v496, 2654435761
          %v529 = vmul.u32 %v497, 2654435761
          %v530 = vmul.u32 %v498, 2654435761
          %v531 = vmul.u32 %v499, 2654435761
          %v532 = vmul.u32 %v500, 2654435761
          %v533 = vmul.u32 %v501, 2654435761
          %v534 = vmul.u32 %v502, 2654435761
          %v535 = vmul.u32 %v503, 2654435761
          %v536 = vmul.u32 %v504, 2654435761
          %v537 = vmul.u32 %v505, 2654435761
          %v538 = vmul.u32 %v506, 2654435761
          %v539 = vmul.u32 %v507, 2654435761
          %v540 = vmul.u32 %v508, 2654435761
          %v541 = vmul.u32 %v509, 2654435761
          %v542 = vmul.u32 %v510, 2654435761
          %v543 = vmul.u32 %v511, 2654435761
          %v544 = vmul.u32 %v512, 2654435761
          %v545 = vmul.u32 %v513, 2654435761
          %v546 = vmul.u32 %v514, 2654435761
          %v547 = vmul.u32 %v515, 2654435761
          %v548 = vmul.u32 %v516, 2654435761
          %v549 = vmul.u32 %v517, 2654435761
          %v550 = vmul.u32 %v518, 2654435761
          %v551 = vmul.u32 %v519, 2654435761
          %v552 = vmul.u32 %v520, 2654435761
          %v553 = vmul.u32 %v521, 2654435761
          %v554 = vstv %s431
          %v555 = vadd.s32 %v522, %v554
          %v556 = vadd.s32 %v523, %v554
          %v557 = vadd.s32 %v524, %v554
          %v558 = vadd.s32 %v525, %v554
          %v559 = vadd.s32 %v526, %v554
          %v560 = vadd.s32 %v527, %v554
          %v561 = vadd.s32 %v528, %v554
          %v562 = vadd.s32 %v529, %v554
          %v563 = vadd.s32 %v530, %v554
          %v564 = vadd.s32 %v531, %v554
          %v565 = vadd.s32 %v532, %v554
          %v566 = vadd.s32 %v533, %v554
          %v567 = vadd.s32 %v534, %v554
          %v568 = vadd.s32 %v535, %v554
          %v569 = vadd.s32 %v536, %v554
          %v570 = vadd.s32 %v537, %v554
          %v571 = vadd.s32 %v538, %v554
          %v572 = vadd.s32 %v539, %v554
          %v573 = vadd.s32 %v540, %v554
          %v574 = vadd.s32 %v541, %v554
          %v575 = vadd.s32 %v542, %v554
          %v576 = vadd.s32 %v543, %v554
          %v577 = vadd.s32 %v544, %v554
          %v578 = vadd.s32 %v545, %v554
          %v579 = vadd.s32 %v546, %v554
          %v580 = vadd.s32 %v547, %v554
          %v581 = vadd.s32 %v548, %v554
          %v582 = vadd.s32 %v549, %v554
          %v583 = vadd.s32 %v550, %v554
          %v584 = vadd.s32 %v551, %v554
          %v585 = vadd.s32 %v552, %v554
          %v586 = vadd.s32 %v553, %v554
          %v587 = vshra.s32 %v555, 16
          %v588 = vshra.s32 %v556, 16
          %v589 = vshra.s32 %v557, 16
          %v590 = vshra.s32 %v558, 16
          %v591 = vshra.s32 %v559, 16
          %v592 = vshra.s32 %v560, 16
          %v593 = vshra.s32 %v561, 16
          %v594 = vshra.s32 %v562, 16
          %v595 = vshra.s32 %v563, 16
          %v596 = vshra.s32 %v564, 16
          %v597 = vshra.s32 %v565, 16
          %v598 = vshra.s32 %v566, 16
          %v599 = vshra.s32 %v567, 16
          %v600 = vshra.s32 %v568, 16
          %v601 = vshra.s32 %v569, 16
          %v602 = vshra.s32 %v570, 16
          %v603 = vshra.s32 %v571, 16
          %v604 = vshra.s32 %v572, 16
          %v605 = vshra.s32 %v573, 16
          %v606 = vshra.s32 %v574, 16
          %v607 = vshra.s32 %v575, 16
          %v608 = vshra.s32 %v576, 16
          %v609 = vshra.s32 %v577, 16
          %v610 = vshra.s32 %v578, 16
          %v611 = vshra.s32 %v579, 16
          %v612 = vshra.s32 %v580, 16
          %v613 = vshra.s32 %v581, 16
          %v614 = vshra.s32 %v582, 16
          %v615 = vshra.s32 %v583, 16
          %v616 = vshra.s32 %v584, 16
          %v617 = vshra.s32 %v585, 16
          %v618 = vshra.s32 %v586, 16
          %v619 = vand.u32 %v587, 65535
          %v620 = vand.u32 %v588, 65535
          %v621 = vand.u32 %v589, 65535
          %v622 = vand.u32 %v590, 65535
          %v623 = vand.u32 %v591, 65535
          %v624 = vand.u32 %v592, 65535
          %v625 = vand.u32 %v593, 65535
          %v626 = vand.u32 %v594, 65535
          %v627 = vand.u32 %v595, 65535
          %v628 = vand.u32 %v596, 65535
          %v629 = vand.u32 %v597, 65535
          %v630 = vand.u32 %v598, 65535
          %v631 = vand.u32 %v599, 65535
          %v632 = vand.u32 %v600, 65535
          %v633 = vand.u32 %v601, 65535
          %v634 = vand.u32 %v602, 65535
          %v635 = vand.u32 %v603, 65535
          %v636 = vand.u32 %v604, 65535
          %v637 = vand.u32 %v605, 65535
          %v638 = vand.u32 %v606, 65535
          %v639 = vand.u32 %v607, 65535
          %v640 = vand.u32 %v608, 65535
          %v641 = vand.u32 %v609, 65535
          %v642 = vand.u32 %v610, 65535
          %v643 = vand.u32 %v611, 65535
          %v644 = vand.u32 %v612, 65535
          %v645 = vand.u32 %v613, 65535
          %v646 = vand.u32 %v614, 65535
          %v647 = vand.u32 %v615, 65535
          %v648 = vand.u32 %v616, 65535
          %v649 = vand.u32 %v617, 65535
          %v650 = vand.u32 %v618, 65535
          %v651 = vxor.u32 %v555, %v619
          %v652 = vxor.u32 %v556, %v620
          %v653 = vxor.u32 %v557, %v621
          %v654 = vxor.u32 %v558, %v622
          %v655 = vxor.u32 %v559, %v623
          %v656 = vxor.u32 %v560, %v624
          %v657 = vxor.u32 %v561, %v625
          %v658 = vxor.u32 %v562, %v626
          %v659 = vxor.u32 %v563, %v627
          %v660 = vxor.u32 %v564, %v628
          %v661 = vxor.u32 %v565, %v629
          %v662 = vxor.u32 %v566, %v630
          %v663 = vxor.u32 %v567, %v631
          %v664 = vxor.u32 %v568, %v632
          %v665 = vxor.u32 %v569, %v633
          %v666 = vxor.u32 %v570, %v634
          %v667 = vxor.u32 %v571, %v635
          %v668 = vxor.u32 %v572, %v636
          %v669 = vxor.u32 %v573, %v637
          %v670 = vxor.u32 %v574, %v638
          %v671 = vxor.u32 %v575, %v639
          %v672 = vxor.u32 %v576, %v640
          %v673 = vxor.u32 %v577, %v641
          %v674 = vxor.u32 %v578, %v642
          %v675 = vxor.u32 %v579, %v643
          %v676 = vxor.u32 %v580, %v644
          %v677 = vxor.u32 %v581, %v645
          %v678 = vxor.u32 %v582, %v646
          %v679 = vxor.u32 %v583, %v647
          %v680 = vxor.u32 %v584, %v648
          %v681 = vxor.u32 %v585, %v649
          %v682 = vxor.u32 %v586, %v650
          %v683 = vmul.u32 %v651, 2246822507
          %v684 = vmul.u32 %v652, 2246822507
          %v685 = vmul.u32 %v653, 2246822507
          %v686 = vmul.u32 %v654, 2246822507
          %v687 = vmul.u32 %v655, 2246822507
          %v688 = vmul.u32 %v656, 2246822507
          %v689 = vmul.u32 %v657, 2246822507
          %v690 = vmul.u32 %v658, 2246822507
          %v691 = vmul.u32 %v659, 2246822507
          %v692 = vmul.u32 %v660, 2246822507
          %v693 = vmul.u32 %v661, 2246822507
          %v694 = vmul.u32 %v662, 2246822507
          %v695 = vmul.u32 %v663, 2246822507
          %v696 = vmul.u32 %v664, 2246822507
          %v697 = vmul.u32 %v665, 2246822507
          %v698 = vmul.u32 %v666, 2246822507
          %v699 = vmul.u32 %v667, 2246822507
          %v700 = vmul.u32 %v668, 2246822507
          %v701 = vmul.u32 %v669, 2246822507
          %v702 = vmul.u32 %v670, 2246822507
          %v703 = vmul.u32 %v671, 2246822507
          %v704 = vmul.u32 %v672, 2246822507
          %v705 = vmul.u32 %v673, 2246822507
          %v706 = vmul.u32 %v674, 2246822507
          %v707 = vmul.u32 %v675, 2246822507
          %v708 = vmul.u32 %v676, 2246822507
          %v709 = vmul.u32 %v677, 2246822507
          %v710 = vmul.u32 %v678, 2246822507
          %v711 = vmul.u32 %v679, 2246822507
          %v712 = vmul.u32 %v680, 2246822507
          %v713 = vmul.u32 %v681, 2246822507
          %v714 = vmul.u32 %v682, 2246822507
          %v715 = vshra.s32 %v683, 13
          %v716 = vshra.s32 %v684, 13
          %v717 = vshra.s32 %v685, 13
          %v718 = vshra.s32 %v686, 13
          %v719 = vshra.s32 %v687, 13
          %v720 = vshra.s32 %v688, 13
          %v721 = vshra.s32 %v689, 13
          %v722 = vshra.s32 %v690, 13
          %v723 = vshra.s32 %v691, 13
          %v724 = vshra.s32 %v692, 13
          %v725 = vshra.s32 %v693, 13
          %v726 = vshra.s32 %v694, 13
          %v727 = vshra.s32 %v695, 13
          %v728 = vshra.s32 %v696, 13
          %v729 = vshra.s32 %v697, 13
          %v730 = vshra.s32 %v698, 13
          %v731 = vshra.s32 %v699, 13
          %v732 = vshra.s32 %v700, 13
          %v733 = vshra.s32 %v701, 13
          %v734 = vshra.s32 %v702, 13
          %v735 = vshra.s32 %v703, 13
          %v736 = vshra.s32 %v704, 13
          %v737 = vshra.s32 %v705, 13
          %v738 = vshra.s32 %v706, 13
          %v739 = vshra.s32 %v707, 13
          %v740 = vshra.s32 %v708, 13
          %v741 = vshra.s32 %v709, 13
          %v742 = vshra.s32 %v710, 13
          %v743 = vshra.s32 %v711, 13
          %v744 = vshra.s32 %v712, 13
          %v745 = vshra.s32 %v713, 13
          %v746 = vshra.s32 %v714, 13
          %v747 = vand.u32 %v715, 524287
          %v748 = vand.u32 %v716, 524287
          %v749 = vand.u32 %v717, 524287
          %v750 = vand.u32 %v718, 524287
          %v751 = vand.u32 %v719, 524287
          %v752 = vand.u32 %v720, 524287
          %v753 = vand.u32 %v721, 524287
          %v754 = vand.u32 %v722, 524287
          %v755 = vand.u32 %v723, 524287
          %v756 = vand.u32 %v724, 524287
          %v757 = vand.u32 %v725, 524287
          %v758 = vand.u32 %v726, 524287
          %v759 = vand.u32 %v727, 524287
          %v760 = vand.u32 %v728, 524287
          %v761 = vand.u32 %v729, 524287
          %v762 = vand.u32 %v730, 524287
          %v763 = vand.u32 %v731, 524287
          %v764 = vand.u32 %v732, 524287
          %v765 = vand.u32 %v733, 524287
          %v766 = vand.u32 %v734, 524287
          %v767 = vand.u32 %v735, 524287
          %v768 = vand.u32 %v736, 524287
          %v769 = vand.u32 %v737, 524287
          %v770 = vand.u32 %v738, 524287
          %v771 = vand.u32 %v739, 524287
          %v772 = vand.u32 %v740, 524287
          %v773 = vand.u32 %v741, 524287
          %v774 = vand.u32 %v742, 524287
          %v775 = vand.u32 %v743, 524287
          %v776 = vand.u32 %v744, 524287
          %v777 = vand.u32 %v745, 524287
          %v778 = vand.u32 %v746, 524287
          %v779 = vxor.u32 %v683, %v747
          %v780 = vxor.u32 %v684, %v748
          %v781 = vxor.u32 %v685, %v749
          %v782 = vxor.u32 %v686, %v750
          %v783 = vxor.u32 %v687, %v751
          %v784 = vxor.u32 %v688, %v752
          %v785 = vxor.u32 %v689, %v753
          %v786 = vxor.u32 %v690, %v754
          %v787 = vxor.u32 %v691, %v755
          %v788 = vxor.u32 %v692, %v756
          %v789 = vxor.u32 %v693, %v757
          %v790 = vxor.u32 %v694, %v758
          %v791 = vxor.u32 %v695, %v759
          %v792 = vxor.u32 %v696, %v760
          %v793 = vxor.u32 %v697, %v761
          %v794 = vxor.u32 %v698, %v762
          %v795 = vxor.u32 %v699, %v763
          %v796 = vxor.u32 %v700, %v764
          %v797 = vxor.u32 %v701, %v765
          %v798 = vxor.u32 %v702, %v766
          %v799 = vxor.u32 %v703, %v767
          %v800 = vxor.u32 %v704, %v768
          %v801 = vxor.u32 %v705, %v769
          %v802 = vxor.u32 %v706, %v770
          %v803 = vxor.u32 %v707, %v771
          %v804 = vxor.u32 %v708, %v772
          %v805 = vxor.u32 %v709, %v773
          %v806 = vxor.u32 %v710, %v774
          %v807 = vxor.u32 %v711, %v775
          %v808 = vxor.u32 %v712, %v776
          %v809 = vxor.u32 %v713, %v777
          %v810 = vxor.u32 %v714, %v778
          %v811 = vmul.u32 %v779, 3266489909
          %v812 = vmul.u32 %v780, 3266489909
          %v813 = vmul.u32 %v781, 3266489909
          %v814 = vmul.u32 %v782, 3266489909
          %v815 = vmul.u32 %v783, 3266489909
          %v816 = vmul.u32 %v784, 3266489909
          %v817 = vmul.u32 %v785, 3266489909
          %v818 = vmul.u32 %v786, 3266489909
          %v819 = vmul.u32 %v787, 3266489909
          %v820 = vmul.u32 %v788, 3266489909
          %v821 = vmul.u32 %v789, 3266489909
          %v822 = vmul.u32 %v790, 3266489909
          %v823 = vmul.u32 %v791, 3266489909
          %v824 = vmul.u32 %v792, 3266489909
          %v825 = vmul.u32 %v793, 3266489909
          %v826 = vmul.u32 %v794, 3266489909
          %v827 = vmul.u32 %v795, 3266489909
          %v828 = vmul.u32 %v796, 3266489909
          %v829 = vmul.u32 %v797, 3266489909
          %v830 = vmul.u32 %v798, 3266489909
          %v831 = vmul.u32 %v799, 3266489909
          %v832 = vmul.u32 %v800, 3266489909
          %v833 = vmul.u32 %v801, 3266489909
          %v834 = vmul.u32 %v802, 3266489909
          %v835 = vmul.u32 %v803, 3266489909
          %v836 = vmul.u32 %v804, 3266489909
          %v837 = vmul.u32 %v805, 3266489909
          %v838 = vmul.u32 %v806, 3266489909
          %v839 = vmul.u32 %v807, 3266489909
          %v840 = vmul.u32 %v808, 3266489909
          %v841 = vmul.u32 %v809, 3266489909
          %v842 = vmul.u32 %v810, 3266489909
          %v843 = vshra.s32 %v811, 16
          %v844 = vshra.s32 %v812, 16
          %v845 = vshra.s32 %v813, 16
          %v846 = vshra.s32 %v814, 16
          %v847 = vshra.s32 %v815, 16
          %v848 = vshra.s32 %v816, 16
          %v849 = vshra.s32 %v817, 16
          %v850 = vshra.s32 %v818, 16
          %v851 = vshra.s32 %v819, 16
          %v852 = vshra.s32 %v820, 16
          %v853 = vshra.s32 %v821, 16
          %v854 = vshra.s32 %v822, 16
          %v855 = vshra.s32 %v823, 16
          %v856 = vshra.s32 %v824, 16
          %v857 = vshra.s32 %v825, 16
          %v858 = vshra.s32 %v826, 16
          %v859 = vshra.s32 %v827, 16
          %v860 = vshra.s32 %v828, 16
          %v861 = vshra.s32 %v829, 16
          %v862 = vshra.s32 %v830, 16
          %v863 = vshra.s32 %v831, 16
          %v864 = vshra.s32 %v832, 16
          %v865 = vshra.s32 %v833, 16
          %v866 = vshra.s32 %v834, 16
          %v867 = vshra.s32 %v835, 16
          %v868 = vshra.s32 %v836, 16
          %v869 = vshra.s32 %v837, 16
          %v870 = vshra.s32 %v838, 16
          %v871 = vshra.s32 %v839, 16
          %v872 = vshra.s32 %v840, 16
          %v873 = vshra.s32 %v841, 16
          %v874 = vshra.s32 %v842, 16
          %v875 = vand.u32 %v843, 65535
          %v876 = vand.u32 %v844, 65535
          %v877 = vand.u32 %v845, 65535
          %v878 = vand.u32 %v846, 65535
          %v879 = vand.u32 %v847, 65535
          %v880 = vand.u32 %v848, 65535
          %v881 = vand.u32 %v849, 65535
          %v882 = vand.u32 %v850, 65535
          %v883 = vand.u32 %v851, 65535
          %v884 = vand.u32 %v852, 65535
          %v885 = vand.u32 %v853, 65535
          %v886 = vand.u32 %v854, 65535
          %v887 = vand.u32 %v855, 65535
          %v888 = vand.u32 %v856, 65535
          %v889 = vand.u32 %v857, 65535
          %v890 = vand.u32 %v858, 65535
          %v891 = vand.u32 %v859, 65535
          %v892 = vand.u32 %v860, 65535
          %v893 = vand.u32 %v861, 65535
          %v894 = vand.u32 %v862, 65535
          %v895 = vand.u32 %v863, 65535
          %v896 = vand.u32 %v864, 65535
          %v897 = vand.u32 %v865, 65535
          %v898 = vand.u32 %v866, 65535
          %v899 = vand.u32 %v867, 65535
          %v900 = vand.u32 %v868, 65535
          %v901 = vand.u32 %v869, 65535
          %v902 = vand.u32 %v870, 65535
          %v903 = vand.u32 %v871, 65535
          %v904 = vand.u32 %v872, 65535
          %v905 = vand.u32 %v873, 65535
          %v906 = vand.u32 %v874, 65535
          %v907 = vxor.u32 %v811, %v875
          %v908 = vxor.u32 %v812, %v876
          %v909 = vxor.u32 %v813, %v877
          %v910 = vxor.u32 %v814, %v878
          %v911 = vxor.u32 %v815, %v879
          %v912 = vxor.u32 %v816, %v880
          %v913 = vxor.u32 %v817, %v881
          %v914 = vxor.u32 %v818, %v882
          %v915 = vxor.u32 %v819, %v883
          %v916 = vxor.u32 %v820, %v884
          %v917 = vxor.u32 %v821, %v885
          %v918 = vxor.u32 %v822, %v886
          %v919 = vxor.u32 %v823, %v887
          %v920 = vxor.u32 %v824, %v888
          %v921 = vxor.u32 %v825, %v889
          %v922 = vxor.u32 %v826, %v890
          %v923 = vxor.u32 %v827, %v891
          %v924 = vxor.u32 %v828, %v892
          %v925 = vxor.u32 %v829, %v893
          %v926 = vxor.u32 %v830, %v894
          %v927 = vxor.u32 %v831, %v895
          %v928 = vxor.u32 %v832, %v896
          %v929 = vxor.u32 %v833, %v897
          %v930 = vxor.u32 %v834, %v898
          %v931 = vxor.u32 %v835, %v899
          %v932 = vxor.u32 %v836, %v900
          %v933 = vxor.u32 %v837, %v901
          %v934 = vxor.u32 %v838, %v902
          %v935 = vxor.u32 %v839, %v903
          %v936 = vxor.u32 %v840, %v904
          %v937 = vxor.u32 %v841, %v905
          %v938 = vxor.u32 %v842, %v906
          %v939 = vand.u32 %v907, 65535
          %v940 = vand.u32 %v908, 65535
          %v941 = vand.u32 %v909, 65535
          %v942 = vand.u32 %v910, 65535
          %v943 = vand.u32 %v911, 65535
          %v944 = vand.u32 %v912, 65535
          %v945 = vand.u32 %v913, 65535
          %v946 = vand.u32 %v914, 65535
          %v947 = vand.u32 %v915, 65535
          %v948 = vand.u32 %v916, 65535
          %v949 = vand.u32 %v917, 65535
          %v950 = vand.u32 %v918, 65535
          %v951 = vand.u32 %v919, 65535
          %v952 = vand.u32 %v920, 65535
          %v953 = vand.u32 %v921, 65535
          %v954 = vand.u32 %v922, 65535
          %v955 = vand.u32 %v923, 65535
          %v956 = vand.u32 %v924, 65535
          %v957 = vand.u32 %v925, 65535
          %v958 = vand.u32 %v926, 65535
          %v959 = vand.u32 %v927, 65535
          %v960 = vand.u32 %v928, 65535
          %v961 = vand.u32 %v929, 65535
          %v962 = vand.u32 %v930, 65535
          %v963 = vand.u32 %v931, 65535
          %v964 = vand.u32 %v932, 65535
          %v965 = vand.u32 %v933, 65535
          %v966 = vand.u32 %v934, 65535
          %v967 = vand.u32 %v935, 65535
          %v968 = vand.u32 %v936, 65535
          %v969 = vand.u32 %v937, 65535
          %v970 = vand.u32 %v938, 65535
          %v971 = vshra.s32 %v907, 16
          %v972 = vshra.s32 %v908, 16
          %v973 = vshra.s32 %v909, 16
          %v974 = vshra.s32 %v910, 16
          %v975 = vshra.s32 %v911, 16
          %v976 = vshra.s32 %v912, 16
          %v977 = vshra.s32 %v913, 16
          %v978 = vshra.s32 %v914, 16
          %v979 = vshra.s32 %v915, 16
          %v980 = vshra.s32 %v916, 16
          %v981 = vshra.s32 %v917, 16
          %v982 = vshra.s32 %v918, 16
          %v983 = vshra.s32 %v919, 16
          %v984 = vshra.s32 %v920, 16
          %v985 = vshra.s32 %v921, 16
          %v986 = vshra.s32 %v922, 16
          %v987 = vshra.s32 %v923, 16
          %v988 = vshra.s32 %v924, 16
          %v989 = vshra.s32 %v925, 16
          %v990 = vshra.s32 %v926, 16
          %v991 = vshra.s32 %v927, 16
          %v992 = vshra.s32 %v928, 16
          %v993 = vshra.s32 %v929, 16
          %v994 = vshra.s32 %v930, 16
          %v995 = vshra.s32 %v931, 16
          %v996 = vshra.s32 %v932, 16
          %v997 = vshra.s32 %v933, 16
          %v998 = vshra.s32 %v934, 16
          %v999 = vshra.s32 %v935, 16
          %v1000 = vshra.s32 %v936, 16
          %v1001 = vshra.s32 %v937, 16
          %v1002 = vshra.s32 %v938, 16
          %v1003 = vand.u32 %v971, 65535
          %v1004 = vand.u32 %v972, 65535
          %v1005 = vand.u32 %v973, 65535
          %v1006 = vand.u32 %v974, 65535
          %v1007 = vand.u32 %v975, 65535
          %v1008 = vand.u32 %v976, 65535
          %v1009 = vand.u32 %v977, 65535
          %v1010 = vand.u32 %v978, 65535
          %v1011 = vand.u32 %v979, 65535
          %v1012 = vand.u32 %v980, 65535
          %v1013 = vand.u32 %v981, 65535
          %v1014 = vand.u32 %v982, 65535
          %v1015 = vand.u32 %v983, 65535
          %v1016 = vand.u32 %v984, 65535
          %v1017 = vand.u32 %v985, 65535
          %v1018 = vand.u32 %v986, 65535
          %v1019 = vand.u32 %v987, 65535
          %v1020 = vand.u32 %v988, 65535
          %v1021 = vand.u32 %v989, 65535
          %v1022 = vand.u32 %v990, 65535
          %v1023 = vand.u32 %v991, 65535
          %v1024 = vand.u32 %v992, 65535
          %v1025 = vand.u32 %v993, 65535
          %v1026 = vand.u32 %v994, 65535
          %v1027 = vand.u32 %v995, 65535
          %v1028 = vand.u32 %v996, 65535
          %v1029 = vand.u32 %v997, 65535
          %v1030 = vand.u32 %v998, 65535
          %v1031 = vand.u32 %v999, 65535
          %v1032 = vand.u32 %v1000, 65535
          %v1033 = vand.u32 %v1001, 65535
          %v1034 = vand.u32 %v1002, 65535
          %vm1035 = vcmp.ge.s32.totalorder %v939, 19661
          %vm1036 = vcmp.ge.s32.totalorder %v940, 19661
          %vm1037 = vcmp.ge.s32.totalorder %v941, 19661
          %vm1038 = vcmp.ge.s32.totalorder %v942, 19661
          %vm1039 = vcmp.ge.s32.totalorder %v943, 19661
          %vm1040 = vcmp.ge.s32.totalorder %v944, 19661
          %vm1041 = vcmp.ge.s32.totalorder %v945, 19661
          %vm1042 = vcmp.ge.s32.totalorder %v946, 19661
          %vm1043 = vcmp.ge.s32.totalorder %v947, 19661
          %vm1044 = vcmp.ge.s32.totalorder %v948, 19661
          %vm1045 = vcmp.ge.s32.totalorder %v949, 19661
          %vm1046 = vcmp.ge.s32.totalorder %v950, 19661
          %vm1047 = vcmp.ge.s32.totalorder %v951, 19661
          %vm1048 = vcmp.ge.s32.totalorder %v952, 19661
          %vm1049 = vcmp.ge.s32.totalorder %v953, 19661
          %vm1050 = vcmp.ge.s32.totalorder %v954, 19661
          %vm1051 = vcmp.ge.s32.totalorder %v955, 19661
          %vm1052 = vcmp.ge.s32.totalorder %v956, 19661
          %vm1053 = vcmp.ge.s32.totalorder %v957, 19661
          %vm1054 = vcmp.ge.s32.totalorder %v958, 19661
          %vm1055 = vcmp.ge.s32.totalorder %v959, 19661
          %vm1056 = vcmp.ge.s32.totalorder %v960, 19661
          %vm1057 = vcmp.ge.s32.totalorder %v961, 19661
          %vm1058 = vcmp.ge.s32.totalorder %v962, 19661
          %vm1059 = vcmp.ge.s32.totalorder %v963, 19661
          %vm1060 = vcmp.ge.s32.totalorder %v964, 19661
          %vm1061 = vcmp.ge.s32.totalorder %v965, 19661
          %vm1062 = vcmp.ge.s32.totalorder %v966, 19661
          %vm1063 = vcmp.ge.s32.totalorder %v967, 19661
          %vm1064 = vcmp.ge.s32.totalorder %v968, 19661
          %vm1065 = vcmp.ge.s32.totalorder %v969, 19661
          %vm1066 = vcmp.ge.s32.totalorder %v970, 19661
          %vm1067 = vcmp.ge.s32.totalorder %v1003, 19661
          %vm1068 = vcmp.ge.s32.totalorder %v1004, 19661
          %vm1069 = vcmp.ge.s32.totalorder %v1005, 19661
          %vm1070 = vcmp.ge.s32.totalorder %v1006, 19661
          %vm1071 = vcmp.ge.s32.totalorder %v1007, 19661
          %vm1072 = vcmp.ge.s32.totalorder %v1008, 19661
          %vm1073 = vcmp.ge.s32.totalorder %v1009, 19661
          %vm1074 = vcmp.ge.s32.totalorder %v1010, 19661
          %vm1075 = vcmp.ge.s32.totalorder %v1011, 19661
          %vm1076 = vcmp.ge.s32.totalorder %v1012, 19661
          %vm1077 = vcmp.ge.s32.totalorder %v1013, 19661
          %vm1078 = vcmp.ge.s32.totalorder %v1014, 19661
          %vm1079 = vcmp.ge.s32.totalorder %v1015, 19661
          %vm1080 = vcmp.ge.s32.totalorder %v1016, 19661
          %vm1081 = vcmp.ge.s32.totalorder %v1017, 19661
          %vm1082 = vcmp.ge.s32.totalorder %v1018, 19661
          %vm1083 = vcmp.ge.s32.totalorder %v1019, 19661
          %vm1084 = vcmp.ge.s32.totalorder %v1020, 19661
          %vm1085 = vcmp.ge.s32.totalorder %v1021, 19661
          %vm1086 = vcmp.ge.s32.totalorder %v1022, 19661
          %vm1087 = vcmp.ge.s32.totalorder %v1023, 19661
          %vm1088 = vcmp.ge.s32.totalorder %v1024, 19661
          %vm1089 = vcmp.ge.s32.totalorder %v1025, 19661
          %vm1090 = vcmp.ge.s32.totalorder %v1026, 19661
          %vm1091 = vcmp.ge.s32.totalorder %v1027, 19661
          %vm1092 = vcmp.ge.s32.totalorder %v1028, 19661
          %vm1093 = vcmp.ge.s32.totalorder %v1029, 19661
          %vm1094 = vcmp.ge.s32.totalorder %v1030, 19661
          %vm1095 = vcmp.ge.s32.totalorder %v1031, 19661
          %vm1096 = vcmp.ge.s32.totalorder %v1032, 19661
          %vm1097 = vcmp.ge.s32.totalorder %v1033, 19661
          %vm1098 = vcmp.ge.s32.totalorder %v1034, 19661
          %v1099 = vsel %vm1035, %v399, 0.0
          %v1100 = vsel %vm1036, %v400, 0.0
          %v1101 = vsel %vm1037, %v401, 0.0
          %v1102 = vsel %vm1038, %v402, 0.0
          %v1103 = vsel %vm1039, %v403, 0.0
          %v1104 = vsel %vm1040, %v404, 0.0
          %v1105 = vsel %vm1041, %v405, 0.0
          %v1106 = vsel %vm1042, %v406, 0.0
          %v1107 = vsel %vm1043, %v407, 0.0
          %v1108 = vsel %vm1044, %v408, 0.0
          %v1109 = vsel %vm1045, %v409, 0.0
          %v1110 = vsel %vm1046, %v410, 0.0
          %v1111 = vsel %vm1047, %v411, 0.0
          %v1112 = vsel %vm1048, %v412, 0.0
          %v1113 = vsel %vm1049, %v413, 0.0
          %v1114 = vsel %vm1050, %v414, 0.0
          %v1115 = vsel %vm1051, %v415, 0.0
          %v1116 = vsel %vm1052, %v416, 0.0
          %v1117 = vsel %vm1053, %v417, 0.0
          %v1118 = vsel %vm1054, %v418, 0.0
          %v1119 = vsel %vm1055, %v419, 0.0
          %v1120 = vsel %vm1056, %v420, 0.0
          %v1121 = vsel %vm1057, %v421, 0.0
          %v1122 = vsel %vm1058, %v422, 0.0
          %v1123 = vsel %vm1059, %v423, 0.0
          %v1124 = vsel %vm1060, %v424, 0.0
          %v1125 = vsel %vm1061, %v425, 0.0
          %v1126 = vsel %vm1062, %v426, 0.0
          %v1127 = vsel %vm1063, %v427, 0.0
          %v1128 = vsel %vm1064, %v428, 0.0
          %v1129 = vsel %vm1065, %v429, 0.0
          %v1130 = vsel %vm1066, %v430, 0.0
          %v1131 = vsel %vm1067, %v399, 0.0
          %v1132 = vsel %vm1068, %v400, 0.0
          %v1133 = vsel %vm1069, %v401, 0.0
          %v1134 = vsel %vm1070, %v402, 0.0
          %v1135 = vsel %vm1071, %v403, 0.0
          %v1136 = vsel %vm1072, %v404, 0.0
          %v1137 = vsel %vm1073, %v405, 0.0
          %v1138 = vsel %vm1074, %v406, 0.0
          %v1139 = vsel %vm1075, %v407, 0.0
          %v1140 = vsel %vm1076, %v408, 0.0
          %v1141 = vsel %vm1077, %v409, 0.0
          %v1142 = vsel %vm1078, %v410, 0.0
          %v1143 = vsel %vm1079, %v411, 0.0
          %v1144 = vsel %vm1080, %v412, 0.0
          %v1145 = vsel %vm1081, %v413, 0.0
          %v1146 = vsel %vm1082, %v414, 0.0
          %v1147 = vsel %vm1083, %v415, 0.0
          %v1148 = vsel %vm1084, %v416, 0.0
          %v1149 = vsel %vm1085, %v417, 0.0
          %v1150 = vsel %vm1086, %v418, 0.0
          %v1151 = vsel %vm1087, %v419, 0.0
          %v1152 = vsel %vm1088, %v420, 0.0
          %v1153 = vsel %vm1089, %v421, 0.0
          %v1154 = vsel %vm1090, %v422, 0.0
          %v1155 = vsel %vm1091, %v423, 0.0
          %v1156 = vsel %vm1092, %v424, 0.0
          %v1157 = vsel %vm1093, %v425, 0.0
          %v1158 = vsel %vm1094, %v426, 0.0
          %v1159 = vsel %vm1095, %v427, 0.0
          %v1160 = vsel %vm1096, %v428, 0.0
          %v1161 = vsel %vm1097, %v429, 0.0
          %v1162 = vsel %vm1098, %v430, 0.0
          %v1163 = vsub.f32 %v1131, %v1099
          %v1164 = vsub.f32 %v1132, %v1100
          %v1165 = vsub.f32 %v1133, %v1101
          %v1166 = vsub.f32 %v1134, %v1102
          %v1167 = vsub.f32 %v1135, %v1103
          %v1168 = vsub.f32 %v1136, %v1104
          %v1169 = vsub.f32 %v1137, %v1105
          %v1170 = vsub.f32 %v1138, %v1106
          %v1171 = vsub.f32 %v1139, %v1107
          %v1172 = vsub.f32 %v1140, %v1108
          %v1173 = vsub.f32 %v1141, %v1109
          %v1174 = vsub.f32 %v1142, %v1110
          %v1175 = vsub.f32 %v1143, %v1111
          %v1176 = vsub.f32 %v1144, %v1112
          %v1177 = vsub.f32 %v1145, %v1113
          %v1178 = vsub.f32 %v1146, %v1114
          %v1179 = vsub.f32 %v1147, %v1115
          %v1180 = vsub.f32 %v1148, %v1116
          %v1181 = vsub.f32 %v1149, %v1117
          %v1182 = vsub.f32 %v1150, %v1118
          %v1183 = vsub.f32 %v1151, %v1119
          %v1184 = vsub.f32 %v1152, %v1120
          %v1185 = vsub.f32 %v1153, %v1121
          %v1186 = vsub.f32 %v1154, %v1122
          %v1187 = vsub.f32 %v1155, %v1123
          %v1188 = vsub.f32 %v1156, %v1124
          %v1189 = vsub.f32 %v1157, %v1125
          %v1190 = vsub.f32 %v1158, %v1126
          %v1191 = vsub.f32 %v1159, %v1127
          %v1192 = vsub.f32 %v1160, %v1128
          %v1193 = vsub.f32 %v1161, %v1129
          %v1194 = vsub.f32 %v1162, %v1130
          %s1195 = smul.u32 %s37, 64
          %s1196 = smul.addr %s1195, 8
          %s1197 = scalar_lea.vmem [#allocation3], %s1196
          %1198 = vst [vmem:[%s1197] sm:$0xff] %v1099
          %1199 = vst [vmem:[%s1197 + $0x8] sm:$0xff] %v1100
          %1200 = vst [vmem:[%s1197 + $0x10] sm:$0xff] %v1101
          %1201 = vst [vmem:[%s1197 + $0x18] sm:$0xff] %v1102
          %1202 = vst [vmem:[%s1197 + $0x20] sm:$0xff] %v1103
          %1203 = vst [vmem:[%s1197 + $0x28] sm:$0xff] %v1104
          %1204 = vst [vmem:[%s1197 + $0x30] sm:$0xff] %v1105
          %1205 = vst [vmem:[%s1197 + $0x38] sm:$0xff] %v1106
          %1206 = vst [vmem:[%s1197 + $0x40] sm:$0xff] %v1107
          %1207 = vst [vmem:[%s1197 + $0x48] sm:$0xff] %v1108
          %1208 = vst [vmem:[%s1197 + $0x50] sm:$0xff] %v1109
          %1209 = vst [vmem:[%s1197 + $0x58] sm:$0xff] %v1110
          %1210 = vst [vmem:[%s1197 + $0x60] sm:$0xff] %v1111
          %1211 = vst [vmem:[%s1197 + $0x68] sm:$0xff] %v1112
          %1212 = vst [vmem:[%s1197 + $0x70] sm:$0xff] %v1113
          %1213 = vst [vmem:[%s1197 + $0x78] sm:$0xff] %v1114
          %1214 = vst [vmem:[%s1197 + $0x80] sm:$0xff] %v1115
          %1215 = vst [vmem:[%s1197 + $0x88] sm:$0xff] %v1116
          %1216 = vst [vmem:[%s1197 + $0x90] sm:$0xff] %v1117
          %1217 = vst [vmem:[%s1197 + $0x98] sm:$0xff] %v1118
          %1218 = vst [vmem:[%s1197 + $0xa0] sm:$0xff] %v1119
          %1219 = vst [vmem:[%s1197 + $0xa8] sm:$0xff] %v1120
          %1220 = vst [vmem:[%s1197 + $0xb0] sm:$0xff] %v1121
          %1221 = vst [vmem:[%s1197 + $0xb8] sm:$0xff] %v1122
          %1222 = vst [vmem:[%s1197 + $0xc0] sm:$0xff] %v1123
          %1223 = vst [vmem:[%s1197 + $0xc8] sm:$0xff] %v1124
          %1224 = vst [vmem:[%s1197 + $0xd0] sm:$0xff] %v1125
          %1225 = vst [vmem:[%s1197 + $0xd8] sm:$0xff] %v1126
          %1226 = vst [vmem:[%s1197 + $0xe0] sm:$0xff] %v1127
          %1227 = vst [vmem:[%s1197 + $0xe8] sm:$0xff] %v1128
          %1228 = vst [vmem:[%s1197 + $0xf0] sm:$0xff] %v1129
          %1229 = vst [vmem:[%s1197 + $0xf8] sm:$0xff] %v1130
          %1230 = vst [vmem:[%s1197 + $0x100] sm:$0xff] %v1163
          %1231 = vst [vmem:[%s1197 + $0x108] sm:$0xff] %v1164
          %1232 = vst [vmem:[%s1197 + $0x110] sm:$0xff] %v1165
          %1233 = vst [vmem:[%s1197 + $0x118] sm:$0xff] %v1166
          %1234 = vst [vmem:[%s1197 + $0x120] sm:$0xff] %v1167
          %1235 = vst [vmem:[%s1197 + $0x128] sm:$0xff] %v1168
          %1236 = vst [vmem:[%s1197 + $0x130] sm:$0xff] %v1169
          %1237 = vst [vmem:[%s1197 + $0x138] sm:$0xff] %v1170
          %1238 = vst [vmem:[%s1197 + $0x140] sm:$0xff] %v1171
          %1239 = vst [vmem:[%s1197 + $0x148] sm:$0xff] %v1172
          %1240 = vst [vmem:[%s1197 + $0x150] sm:$0xff] %v1173
          %1241 = vst [vmem:[%s1197 + $0x158] sm:$0xff] %v1174
          %1242 = vst [vmem:[%s1197 + $0x160] sm:$0xff] %v1175
          %1243 = vst [vmem:[%s1197 + $0x168] sm:$0xff] %v1176
          %1244 = vst [vmem:[%s1197 + $0x170] sm:$0xff] %v1177
          %1245 = vst [vmem:[%s1197 + $0x178] sm:$0xff] %v1178
          %1246 = vst [vmem:[%s1197 + $0x180] sm:$0xff] %v1179
          %1247 = vst [vmem:[%s1197 + $0x188] sm:$0xff] %v1180
          %1248 = vst [vmem:[%s1197 + $0x190] sm:$0xff] %v1181
          %1249 = vst [vmem:[%s1197 + $0x198] sm:$0xff] %v1182
          %1250 = vst [vmem:[%s1197 + $0x1a0] sm:$0xff] %v1183
          %1251 = vst [vmem:[%s1197 + $0x1a8] sm:$0xff] %v1184
          %1252 = vst [vmem:[%s1197 + $0x1b0] sm:$0xff] %v1185
          %1253 = vst [vmem:[%s1197 + $0x1b8] sm:$0xff] %v1186
          %1254 = vst [vmem:[%s1197 + $0x1c0] sm:$0xff] %v1187
          %1255 = vst [vmem:[%s1197 + $0x1c8] sm:$0xff] %v1188
          %1256 = vst [vmem:[%s1197 + $0x1d0] sm:$0xff] %v1189
          %1257 = vst [vmem:[%s1197 + $0x1d8] sm:$0xff] %v1190
          %1258 = vst [vmem:[%s1197 + $0x1e0] sm:$0xff] %v1191
          %1259 = vst [vmem:[%s1197 + $0x1e8] sm:$0xff] %v1192
          %1260 = vst [vmem:[%s1197 + $0x1f0] sm:$0xff] %v1193
          %1261 = vst [vmem:[%s1197 + $0x1f8] sm:$0xff] %v1194
        $region48: #{tpu_custom_call.1} parent=31 // pred_fallthru
          _
        %v1262 = vld [vmem:[#allocation2] sm:$0xff]
        %v1263 = vld [vmem:[#allocation2 + $0x8] sm:$0xff]
        %v1264 = vld [vmem:[#allocation2 + $0x10] sm:$0xff]
        %v1265 = vld [vmem:[#allocation2 + $0x18] sm:$0xff]
        %v1266 = vld [vmem:[#allocation2 + $0x20] sm:$0xff]
        %v1267 = vld [vmem:[#allocation2 + $0x28] sm:$0xff]
        %v1268 = vld [vmem:[#allocation2 + $0x30] sm:$0xff]
        %v1269 = vld [vmem:[#allocation2 + $0x38] sm:$0xff]
        %v1270 = vld [vmem:[#allocation2 + $0x40] sm:$0xff]
        %v1271 = vld [vmem:[#allocation2 + $0x48] sm:$0xff]
        %v1272 = vld [vmem:[#allocation2 + $0x50] sm:$0xff]
        %v1273 = vld [vmem:[#allocation2 + $0x58] sm:$0xff]
        %v1274 = vld [vmem:[#allocation2 + $0x60] sm:$0xff]
        %v1275 = vld [vmem:[#allocation2 + $0x68] sm:$0xff]
        %v1276 = vld [vmem:[#allocation2 + $0x70] sm:$0xff]
        %v1277 = vld [vmem:[#allocation2 + $0x78] sm:$0xff]
        %v1278 = vld [vmem:[#allocation2 + $0x80] sm:$0xff]
        %v1279 = vld [vmem:[#allocation2 + $0x88] sm:$0xff]
        %v1280 = vld [vmem:[#allocation2 + $0x90] sm:$0xff]
        %v1281 = vld [vmem:[#allocation2 + $0x98] sm:$0xff]
        %v1282 = vld [vmem:[#allocation2 + $0xa0] sm:$0xff]
        %v1283 = vld [vmem:[#allocation2 + $0xa8] sm:$0xff]
        %v1284 = vld [vmem:[#allocation2 + $0xb0] sm:$0xff]
        %v1285 = vld [vmem:[#allocation2 + $0xb8] sm:$0xff]
        %v1286 = vld [vmem:[#allocation2 + $0xc0] sm:$0xff]
        %v1287 = vld [vmem:[#allocation2 + $0xc8] sm:$0xff]
        %v1288 = vld [vmem:[#allocation2 + $0xd0] sm:$0xff]
        %v1289 = vld [vmem:[#allocation2 + $0xd8] sm:$0xff]
        %v1290 = vld [vmem:[#allocation2 + $0xe0] sm:$0xff]
        %v1291 = vld [vmem:[#allocation2 + $0xe8] sm:$0xff]
        %v1292 = vld [vmem:[#allocation2 + $0xf0] sm:$0xff]
        %v1293 = vld [vmem:[#allocation2 + $0xf8] sm:$0xff]
        %v1294 = vld [vmem:[#allocation2 + $0x100] sm:$0xff]
        %v1295 = vld [vmem:[#allocation2 + $0x108] sm:$0xff]
        %v1296 = vld [vmem:[#allocation2 + $0x110] sm:$0xff]
        %v1297 = vld [vmem:[#allocation2 + $0x118] sm:$0xff]
        %v1298 = vld [vmem:[#allocation2 + $0x120] sm:$0xff]
        %v1299 = vld [vmem:[#allocation2 + $0x128] sm:$0xff]
        %v1300 = vld [vmem:[#allocation2 + $0x130] sm:$0xff]
        %v1301 = vld [vmem:[#allocation2 + $0x138] sm:$0xff]
        %v1302 = vld [vmem:[#allocation2 + $0x140] sm:$0xff]
        %v1303 = vld [vmem:[#allocation2 + $0x148] sm:$0xff]
        %v1304 = vld [vmem:[#allocation2 + $0x150] sm:$0xff]
        %v1305 = vld [vmem:[#allocation2 + $0x158] sm:$0xff]
        %v1306 = vld [vmem:[#allocation2 + $0x160] sm:$0xff]
        %v1307 = vld [vmem:[#allocation2 + $0x168] sm:$0xff]
        %v1308 = vld [vmem:[#allocation2 + $0x170] sm:$0xff]
        %v1309 = vld [vmem:[#allocation2 + $0x178] sm:$0xff]
        %v1310 = vld [vmem:[#allocation2 + $0x180] sm:$0xff]
        %v1311 = vld [vmem:[#allocation2 + $0x188] sm:$0xff]
        %v1312 = vld [vmem:[#allocation2 + $0x190] sm:$0xff]
        %v1313 = vld [vmem:[#allocation2 + $0x198] sm:$0xff]
        %v1314 = vld [vmem:[#allocation2 + $0x1a0] sm:$0xff]
        %v1315 = vld [vmem:[#allocation2 + $0x1a8] sm:$0xff]
        %v1316 = vld [vmem:[#allocation2 + $0x1b0] sm:$0xff]
        %v1317 = vld [vmem:[#allocation2 + $0x1b8] sm:$0xff]
        %v1318 = vld [vmem:[#allocation2 + $0x1c0] sm:$0xff]
        %v1319 = vld [vmem:[#allocation2 + $0x1c8] sm:$0xff]
        %v1320 = vld [vmem:[#allocation2 + $0x1d0] sm:$0xff]
        %v1321 = vld [vmem:[#allocation2 + $0x1d8] sm:$0xff]
        %v1322 = vld [vmem:[#allocation2 + $0x1e0] sm:$0xff]
        %v1323 = vld [vmem:[#allocation2 + $0x1e8] sm:$0xff]
        %v1324 = vld [vmem:[#allocation2 + $0x1f0] sm:$0xff]
        %v1325 = vld [vmem:[#allocation2 + $0x1f8] sm:$0xff]
        %s1326 = smul.u32 %s37, 64
        %s1327 = smul.addr %s1326, 8
        %s1328 = scalar_lea.vmem [#allocation3], %s1327
        %v1329 = vld [vmem:[%s1328] sm:$0xff]
        %v1330 = vld [vmem:[%s1328 + $0x8] sm:$0xff]
        %v1331 = vld [vmem:[%s1328 + $0x10] sm:$0xff]
        %v1332 = vld [vmem:[%s1328 + $0x18] sm:$0xff]
        %v1333 = vld [vmem:[%s1328 + $0x20] sm:$0xff]
        %v1334 = vld [vmem:[%s1328 + $0x28] sm:$0xff]
        %v1335 = vld [vmem:[%s1328 + $0x30] sm:$0xff]
        %v1336 = vld [vmem:[%s1328 + $0x38] sm:$0xff]
        %v1337 = vld [vmem:[%s1328 + $0x40] sm:$0xff]
        %v1338 = vld [vmem:[%s1328 + $0x48] sm:$0xff]
        %v1339 = vld [vmem:[%s1328 + $0x50] sm:$0xff]
        %v1340 = vld [vmem:[%s1328 + $0x58] sm:$0xff]
        %v1341 = vld [vmem:[%s1328 + $0x60] sm:$0xff]
        %v1342 = vld [vmem:[%s1328 + $0x68] sm:$0xff]
        %v1343 = vld [vmem:[%s1328 + $0x70] sm:$0xff]
        %v1344 = vld [vmem:[%s1328 + $0x78] sm:$0xff]
        %v1345 = vld [vmem:[%s1328 + $0x80] sm:$0xff]
        %v1346 = vld [vmem:[%s1328 + $0x88] sm:$0xff]
        %v1347 = vld [vmem:[%s1328 + $0x90] sm:$0xff]
        %v1348 = vld [vmem:[%s1328 + $0x98] sm:$0xff]
        %v1349 = vld [vmem:[%s1328 + $0xa0] sm:$0xff]
        %v1350 = vld [vmem:[%s1328 + $0xa8] sm:$0xff]
        %v1351 = vld [vmem:[%s1328 + $0xb0] sm:$0xff]
        %v1352 = vld [vmem:[%s1328 + $0xb8] sm:$0xff]
        %v1353 = vld [vmem:[%s1328 + $0xc0] sm:$0xff]
        %v1354 = vld [vmem:[%s1328 + $0xc8] sm:$0xff]
        %v1355 = vld [vmem:[%s1328 + $0xd0] sm:$0xff]
        %v1356 = vld [vmem:[%s1328 + $0xd8] sm:$0xff]
        %v1357 = vld [vmem:[%s1328 + $0xe0] sm:$0xff]
        %v1358 = vld [vmem:[%s1328 + $0xe8] sm:$0xff]
        %v1359 = vld [vmem:[%s1328 + $0xf0] sm:$0xff]
        %v1360 = vld [vmem:[%s1328 + $0xf8] sm:$0xff]
        %v1361 = vld [vmem:[%s1328 + $0x100] sm:$0xff]
        %v1362 = vld [vmem:[%s1328 + $0x108] sm:$0xff]
        %v1363 = vld [vmem:[%s1328 + $0x110] sm:$0xff]
        %v1364 = vld [vmem:[%s1328 + $0x118] sm:$0xff]
        %v1365 = vld [vmem:[%s1328 + $0x120] sm:$0xff]
        %v1366 = vld [vmem:[%s1328 + $0x128] sm:$0xff]
        %v1367 = vld [vmem:[%s1328 + $0x130] sm:$0xff]
        %v1368 = vld [vmem:[%s1328 + $0x138] sm:$0xff]
        %v1369 = vld [vmem:[%s1328 + $0x140] sm:$0xff]
        %v1370 = vld [vmem:[%s1328 + $0x148] sm:$0xff]
        %v1371 = vld [vmem:[%s1328 + $0x150] sm:$0xff]
        %v1372 = vld [vmem:[%s1328 + $0x158] sm:$0xff]
        %v1373 = vld [vmem:[%s1328 + $0x160] sm:$0xff]
        %v1374 = vld [vmem:[%s1328 + $0x168] sm:$0xff]
        %v1375 = vld [vmem:[%s1328 + $0x170] sm:$0xff]
        %v1376 = vld [vmem:[%s1328 + $0x178] sm:$0xff]
        %v1377 = vld [vmem:[%s1328 + $0x180] sm:$0xff]
        %v1378 = vld [vmem:[%s1328 + $0x188] sm:$0xff]
        %v1379 = vld [vmem:[%s1328 + $0x190] sm:$0xff]
        %v1380 = vld [vmem:[%s1328 + $0x198] sm:$0xff]
        %v1381 = vld [vmem:[%s1328 + $0x1a0] sm:$0xff]
        %v1382 = vld [vmem:[%s1328 + $0x1a8] sm:$0xff]
        %v1383 = vld [vmem:[%s1328 + $0x1b0] sm:$0xff]
        %v1384 = vld [vmem:[%s1328 + $0x1b8] sm:$0xff]
        %v1385 = vld [vmem:[%s1328 + $0x1c0] sm:$0xff]
        %v1386 = vld [vmem:[%s1328 + $0x1c8] sm:$0xff]
        %v1387 = vld [vmem:[%s1328 + $0x1d0] sm:$0xff]
        %v1388 = vld [vmem:[%s1328 + $0x1d8] sm:$0xff]
        %v1389 = vld [vmem:[%s1328 + $0x1e0] sm:$0xff]
        %v1390 = vld [vmem:[%s1328 + $0x1e8] sm:$0xff]
        %v1391 = vld [vmem:[%s1328 + $0x1f0] sm:$0xff]
        %v1392 = vld [vmem:[%s1328 + $0x1f8] sm:$0xff]
        %v1393 = vld [vmem:[%s277] sm:$0xff]
        %v1394 = vld [vmem:[%s277 + $0x8] sm:$0xff]
        %v1395 = vld [vmem:[%s277 + $0x10] sm:$0xff]
        %v1396 = vld [vmem:[%s277 + $0x18] sm:$0xff]
        %v1397 = vld [vmem:[%s277 + $0x20] sm:$0xff]
        %v1398 = vld [vmem:[%s277 + $0x28] sm:$0xff]
        %v1399 = vld [vmem:[%s277 + $0x30] sm:$0xff]
        %v1400 = vld [vmem:[%s277 + $0x38] sm:$0xff]
        %v1401 = vld [vmem:[%s277 + $0x40] sm:$0xff]
        %v1402 = vld [vmem:[%s277 + $0x48] sm:$0xff]
        %v1403 = vld [vmem:[%s277 + $0x50] sm:$0xff]
        %v1404 = vld [vmem:[%s277 + $0x58] sm:$0xff]
        %v1405 = vld [vmem:[%s277 + $0x60] sm:$0xff]
        %v1406 = vld [vmem:[%s277 + $0x68] sm:$0xff]
        %v1407 = vld [vmem:[%s277 + $0x70] sm:$0xff]
        %v1408 = vld [vmem:[%s277 + $0x78] sm:$0xff]
        %v1409 = vld [vmem:[%s277 + $0x80] sm:$0xff]
        %v1410 = vld [vmem:[%s277 + $0x88] sm:$0xff]
        %v1411 = vld [vmem:[%s277 + $0x90] sm:$0xff]
        %v1412 = vld [vmem:[%s277 + $0x98] sm:$0xff]
        %v1413 = vld [vmem:[%s277 + $0xa0] sm:$0xff]
        %v1414 = vld [vmem:[%s277 + $0xa8] sm:$0xff]
        %v1415 = vld [vmem:[%s277 + $0xb0] sm:$0xff]
        %v1416 = vld [vmem:[%s277 + $0xb8] sm:$0xff]
        %v1417 = vld [vmem:[%s277 + $0xc0] sm:$0xff]
        %v1418 = vld [vmem:[%s277 + $0xc8] sm:$0xff]
        %v1419 = vld [vmem:[%s277 + $0xd0] sm:$0xff]
        %v1420 = vld [vmem:[%s277 + $0xd8] sm:$0xff]
        %v1421 = vld [vmem:[%s277 + $0xe0] sm:$0xff]
        %v1422 = vld [vmem:[%s277 + $0xe8] sm:$0xff]
        %v1423 = vld [vmem:[%s277 + $0xf0] sm:$0xff]
        %v1424 = vld [vmem:[%s277 + $0xf8] sm:$0xff]
        %v1425 = vld [vmem:[%s277 + $0x100] sm:$0xff]
        %v1426 = vld [vmem:[%s277 + $0x108] sm:$0xff]
        %v1427 = vld [vmem:[%s277 + $0x110] sm:$0xff]
        %v1428 = vld [vmem:[%s277 + $0x118] sm:$0xff]
        %v1429 = vld [vmem:[%s277 + $0x120] sm:$0xff]
        %v1430 = vld [vmem:[%s277 + $0x128] sm:$0xff]
        %v1431 = vld [vmem:[%s277 + $0x130] sm:$0xff]
        %v1432 = vld [vmem:[%s277 + $0x138] sm:$0xff]
        %v1433 = vld [vmem:[%s277 + $0x140] sm:$0xff]
        %v1434 = vld [vmem:[%s277 + $0x148] sm:$0xff]
        %v1435 = vld [vmem:[%s277 + $0x150] sm:$0xff]
        %v1436 = vld [vmem:[%s277 + $0x158] sm:$0xff]
        %v1437 = vld [vmem:[%s277 + $0x160] sm:$0xff]
        %v1438 = vld [vmem:[%s277 + $0x168] sm:$0xff]
        %v1439 = vld [vmem:[%s277 + $0x170] sm:$0xff]
        %v1440 = vld [vmem:[%s277 + $0x178] sm:$0xff]
        %v1441 = vld [vmem:[%s277 + $0x180] sm:$0xff]
        %v1442 = vld [vmem:[%s277 + $0x188] sm:$0xff]
        %v1443 = vld [vmem:[%s277 + $0x190] sm:$0xff]
        %v1444 = vld [vmem:[%s277 + $0x198] sm:$0xff]
        %v1445 = vld [vmem:[%s277 + $0x1a0] sm:$0xff]
        %v1446 = vld [vmem:[%s277 + $0x1a8] sm:$0xff]
        %v1447 = vld [vmem:[%s277 + $0x1b0] sm:$0xff]
        %v1448 = vld [vmem:[%s277 + $0x1b8] sm:$0xff]
        %v1449 = vld [vmem:[%s277 + $0x1c0] sm:$0xff]
        %v1450 = vld [vmem:[%s277 + $0x1c8] sm:$0xff]
        %v1451 = vld [vmem:[%s277 + $0x1d0] sm:$0xff]
        %v1452 = vld [vmem:[%s277 + $0x1d8] sm:$0xff]
        %v1453 = vld [vmem:[%s277 + $0x1e0] sm:$0xff]
        %v1454 = vld [vmem:[%s277 + $0x1e8] sm:$0xff]
        %v1455 = vld [vmem:[%s277 + $0x1f0] sm:$0xff]
        %v1456 = vld [vmem:[%s277 + $0x1f8] sm:$0xff]
        %1457 = vmatprep.subr.mxu0 %v1424
        %1458 = vmatpush1.msra.mxu0 %v1423
        %1459 = vmatprep.subr.mxu0 %v1422
        %1460 = vmatpush1.msra.mxu0 %v1421
        %1461 = vmatprep.subr.mxu0 %v1420
        %1462 = vmatpush1.msra.mxu0 %v1419
        %1463 = vmatprep.subr.mxu0 %v1418
        %1464 = vmatpush1.msra.mxu0 %v1417
        %1465 = vmatprep.subr.mxu0 %v1416
        %1466 = vmatpush1.msra.mxu0 %v1415
        %1467 = vmatprep.subr.mxu0 %v1414
        %1468 = vmatpush1.msra.mxu0 %v1413
        %1469 = vmatprep.subr.mxu0 %v1412
        %1470 = vmatpush1.msra.mxu0 %v1411
        %1471 = vmatprep.subr.mxu0 %v1410
        %1472 = vmatpush1.msra.mxu0 %v1409
        %1473 = vmatprep.subr.mxu0 %v1408
        %1474 = vmatpush1.msra.mxu0 %v1407
        %1475 = vmatprep.subr.mxu0 %v1406
        %1476 = vmatpush1.msra.mxu0 %v1405
        %1477 = vmatprep.subr.mxu0 %v1404
        %1478 = vmatpush1.msra.mxu0 %v1403
        %1479 = vmatprep.subr.mxu0 %v1402
        %1480 = vmatpush1.msra.mxu0 %v1401
        %1481 = vmatprep.subr.mxu0 %v1400
        %1482 = vmatpush1.msra.mxu0 %v1399
        %1483 = vmatprep.subr.mxu0 %v1398
        %1484 = vmatpush1.msra.mxu0 %v1397
        %1485 = vmatprep.subr.mxu0 %v1396
        %1486 = vmatpush1.msra.mxu0 %v1395
        %1487 = vmatprep.subr.mxu0 %v1394
        %1488 = vmatpush1.msra.mxu0 %v1393
        %1489 = vmatprep.subr.mxu0 %v1456
        %1490 = vmatpush2.msra.mxu0 %v1455
        %1491 = vmatprep.subr.mxu0 %v1454
        %1492 = vmatpush2.msra.mxu0 %v1453
        %1493 = vmatprep.subr.mxu0 %v1452
        %1494 = vmatpush2.msra.mxu0 %v1451
        %1495 = vmatprep.subr.mxu0 %v1450
        %1496 = vmatpush2.msra.mxu0 %v1449
        %1497 = vmatprep.subr.mxu0 %v1448
        %1498 = vmatpush2.msra.mxu0 %v1447
        %1499 = vmatprep.subr.mxu0 %v1446
        %1500 = vmatpush2.msra.mxu0 %v1445
        %1501 = vmatprep.subr.mxu0 %v1444
        %1502 = vmatpush2.msra.mxu0 %v1443
        %1503 = vmatprep.subr.mxu0 %v1442
        %1504 = vmatpush2.msra.mxu0 %v1441
        %1505 = vmatprep.subr.mxu0 %v1440
        %1506 = vmatpush2.msra.mxu0 %v1439
        %1507 = vmatprep.subr.mxu0 %v1438
        %1508 = vmatpush2.msra.mxu0 %v1437
        %1509 = vmatprep.subr.mxu0 %v1436
        %1510 = vmatpush2.msra.mxu0 %v1435
        %1511 = vmatprep.subr.mxu0 %v1434
        %1512 = vmatpush2.msra.mxu0 %v1433
        %1513 = vmatprep.subr.mxu0 %v1432
        %1514 = vmatpush2.msra.mxu0 %v1431
        %1515 = vmatprep.subr.mxu0 %v1430
        %1516 = vmatpush2.msra.mxu0 %v1429
        %1517 = vmatprep.subr.mxu0 %v1428
        %1518 = vmatpush2.msra.mxu0 %v1427
        %1519 = vmatprep.subr.mxu0 %v1426
        %1520 = vmatpush2.msra.mxu0 %v1425
        %1521 = vmatprep.mubr.f32.mxu0 %v1330
        %1522 = vmatmul.mubr.f32.gmra.mxu0 %v1329
        %v1523 = vpop.f32.mrf.mxu0
        %v1524 = vadd.f32 0.0, %v1523
        %v1525 = vpop.f32.mrf.mxu0
        %v1526 = vadd.f32 0.0, %v1525
        %1527 = vmatprep.mubr.f32.mxu0 %v1332
        %1528 = vmatmul.mubr.f32.gmra.mxu0 %v1331
        %v1529 = vpop.f32.mrf.mxu0
        %v1530 = vadd.f32 0.0, %v1529
        %v1531 = vpop.f32.mrf.mxu0
        %v1532 = vadd.f32 0.0, %v1531
        %1533 = vmatprep.mubr.f32.mxu0 %v1334
        %1534 = vmatmul.mubr.f32.gmra.mxu0 %v1333
        %v1535 = vpop.f32.mrf.mxu0
        %v1536 = vadd.f32 0.0, %v1535
        %v1537 = vpop.f32.mrf.mxu0
        %v1538 = vadd.f32 0.0, %v1537
        %1539 = vmatprep.mubr.f32.mxu0 %v1336
        %1540 = vmatmul.mubr.f32.gmra.mxu0 %v1335
        %v1541 = vpop.f32.mrf.mxu0
        %v1542 = vadd.f32 0.0, %v1541
        %v1543 = vpop.f32.mrf.mxu0
        %v1544 = vadd.f32 0.0, %v1543
        %1545 = vmatprep.mubr.f32.mxu0 %v1338
        %1546 = vmatmul.mubr.f32.gmra.mxu0 %v1337
        %v1547 = vpop.f32.mrf.mxu0
        %v1548 = vadd.f32 0.0, %v1547
        %v1549 = vpop.f32.mrf.mxu0
        %v1550 = vadd.f32 0.0, %v1549
        %1551 = vmatprep.mubr.f32.mxu0 %v1340
        %1552 = vmatmul.mubr.f32.gmra.mxu0 %v1339
        %v1553 = vpop.f32.mrf.mxu0
        %v1554 = vadd.f32 0.0, %v1553
        %v1555 = vpop.f32.mrf.mxu0
        %v1556 = vadd.f32 0.0, %v1555
        %1557 = vmatprep.mubr.f32.mxu0 %v1342
        %1558 = vmatmul.mubr.f32.gmra.mxu0 %v1341
        %v1559 = vpop.f32.mrf.mxu0
        %v1560 = vadd.f32 0.0, %v1559
        %v1561 = vpop.f32.mrf.mxu0
        %v1562 = vadd.f32 0.0, %v1561
        %1563 = vmatprep.mubr.f32.mxu0 %v1344
        %1564 = vmatmul.mubr.f32.gmra.mxu0 %v1343
        %v1565 = vpop.f32.mrf.mxu0
        %v1566 = vadd.f32 0.0, %v1565
        %v1567 = vpop.f32.mrf.mxu0
        %v1568 = vadd.f32 0.0, %v1567
        %1569 = vmatprep.mubr.f32.mxu0 %v1346
        %1570 = vmatmul.mubr.f32.gmra.mxu0 %v1345
        %v1571 = vpop.f32.mrf.mxu0
        %v1572 = vadd.f32 0.0, %v1571
        %v1573 = vpop.f32.mrf.mxu0
        %v1574 = vadd.f32 0.0, %v1573
        %1575 = vmatprep.mubr.f32.mxu0 %v1348
        %1576 = vmatmul.mubr.f32.gmra.mxu0 %v1347
        %v1577 = vpop.f32.mrf.mxu0
        %v1578 = vadd.f32 0.0, %v1577
        %v1579 = vpop.f32.mrf.mxu0
        %v1580 = vadd.f32 0.0, %v1579
        %1581 = vmatprep.mubr.f32.mxu0 %v1350
        %1582 = vmatmul.mubr.f32.gmra.mxu0 %v1349
        %v1583 = vpop.f32.mrf.mxu0
        %v1584 = vadd.f32 0.0, %v1583
        %v1585 = vpop.f32.mrf.mxu0
        %v1586 = vadd.f32 0.0, %v1585
        %1587 = vmatprep.mubr.f32.mxu0 %v1352
        %1588 = vmatmul.mubr.f32.gmra.mxu0 %v1351
        %v1589 = vpop.f32.mrf.mxu0
        %v1590 = vadd.f32 0.0, %v1589
        %v1591 = vpop.f32.mrf.mxu0
        %v1592 = vadd.f32 0.0, %v1591
        %1593 = vmatprep.mubr.f32.mxu0 %v1354
        %1594 = vmatmul.mubr.f32.gmra.mxu0 %v1353
        %v1595 = vpop.f32.mrf.mxu0
        %v1596 = vadd.f32 0.0, %v1595
        %v1597 = vpop.f32.mrf.mxu0
        %v1598 = vadd.f32 0.0, %v1597
        %1599 = vmatprep.mubr.f32.mxu0 %v1356
        %1600 = vmatmul.mubr.f32.gmra.mxu0 %v1355
        %v1601 = vpop.f32.mrf.mxu0
        %v1602 = vadd.f32 0.0, %v1601
        %v1603 = vpop.f32.mrf.mxu0
        %v1604 = vadd.f32 0.0, %v1603
        %1605 = vmatprep.mubr.f32.mxu0 %v1358
        %1606 = vmatmul.mubr.f32.gmra.mxu0 %v1357
        %v1607 = vpop.f32.mrf.mxu0
        %v1608 = vadd.f32 0.0, %v1607
        %v1609 = vpop.f32.mrf.mxu0
        %v1610 = vadd.f32 0.0, %v1609
        %1611 = vmatprep.mubr.f32.mxu0 %v1360
        %1612 = vmatmul.mubr.f32.gmra.mxu0 %v1359
        %v1613 = vpop.f32.mrf.mxu0
        %v1614 = vadd.f32 0.0, %v1613
        %v1615 = vpop.f32.mrf.mxu0
        %v1616 = vadd.f32 0.0, %v1615
        %1617 = vmatprep.mubr.f32.mxu0 %v1362
        %1618 = vmatmul.mubr.f32.gmra.mxu0 %v1361
        %v1619 = vpop.f32.mrf.mxu0
        %v1620 = vadd.f32 0.0, %v1619
        %v1621 = vpop.f32.mrf.mxu0
        %v1622 = vadd.f32 0.0, %v1621
        %1623 = vmatprep.mubr.f32.mxu0 %v1364
        %1624 = vmatmul.mubr.f32.gmra.mxu0 %v1363
        %v1625 = vpop.f32.mrf.mxu0
        %v1626 = vadd.f32 0.0, %v1625
        %v1627 = vpop.f32.mrf.mxu0
        %v1628 = vadd.f32 0.0, %v1627
        %1629 = vmatprep.mubr.f32.mxu0 %v1366
        %1630 = vmatmul.mubr.f32.gmra.mxu0 %v1365
        %v1631 = vpop.f32.mrf.mxu0
        %v1632 = vadd.f32 0.0, %v1631
        %v1633 = vpop.f32.mrf.mxu0
        %v1634 = vadd.f32 0.0, %v1633
        %1635 = vmatprep.mubr.f32.mxu0 %v1368
        %1636 = vmatmul.mubr.f32.gmra.mxu0 %v1367
        %v1637 = vpop.f32.mrf.mxu0
        %v1638 = vadd.f32 0.0, %v1637
        %v1639 = vpop.f32.mrf.mxu0
        %v1640 = vadd.f32 0.0, %v1639
        %1641 = vmatprep.mubr.f32.mxu0 %v1370
        %1642 = vmatmul.mubr.f32.gmra.mxu0 %v1369
        %v1643 = vpop.f32.mrf.mxu0
        %v1644 = vadd.f32 0.0, %v1643
        %v1645 = vpop.f32.mrf.mxu0
        %v1646 = vadd.f32 0.0, %v1645
        %1647 = vmatprep.mubr.f32.mxu0 %v1372
        %1648 = vmatmul.mubr.f32.gmra.mxu0 %v1371
        %v1649 = vpop.f32.mrf.mxu0
        %v1650 = vadd.f32 0.0, %v1649
        %v1651 = vpop.f32.mrf.mxu0
        %v1652 = vadd.f32 0.0, %v1651
        %1653 = vmatprep.mubr.f32.mxu0 %v1374
        %1654 = vmatmul.mubr.f32.gmra.mxu0 %v1373
        %v1655 = vpop.f32.mrf.mxu0
        %v1656 = vadd.f32 0.0, %v1655
        %v1657 = vpop.f32.mrf.mxu0
        %v1658 = vadd.f32 0.0, %v1657
        %1659 = vmatprep.mubr.f32.mxu0 %v1376
        %1660 = vmatmul.mubr.f32.gmra.mxu0 %v1375
        %v1661 = vpop.f32.mrf.mxu0
        %v1662 = vadd.f32 0.0, %v1661
        %v1663 = vpop.f32.mrf.mxu0
        %v1664 = vadd.f32 0.0, %v1663
        %1665 = vmatprep.mubr.f32.mxu0 %v1378
        %1666 = vmatmul.mubr.f32.gmra.mxu0 %v1377
        %v1667 = vpop.f32.mrf.mxu0
        %v1668 = vadd.f32 0.0, %v1667
        %v1669 = vpop.f32.mrf.mxu0
        %v1670 = vadd.f32 0.0, %v1669
        %1671 = vmatprep.mubr.f32.mxu0 %v1380
        %1672 = vmatmul.mubr.f32.gmra.mxu0 %v1379
        %v1673 = vpop.f32.mrf.mxu0
        %v1674 = vadd.f32 0.0, %v1673
        %v1675 = vpop.f32.mrf.mxu0
        %v1676 = vadd.f32 0.0, %v1675
        %1677 = vmatprep.mubr.f32.mxu0 %v1382
        %1678 = vmatmul.mubr.f32.gmra.mxu0 %v1381
        %v1679 = vpop.f32.mrf.mxu0
        %v1680 = vadd.f32 0.0, %v1679
        %v1681 = vpop.f32.mrf.mxu0
        %v1682 = vadd.f32 0.0, %v1681
        %1683 = vmatprep.mubr.f32.mxu0 %v1384
        %1684 = vmatmul.mubr.f32.gmra.mxu0 %v1383
        %v1685 = vpop.f32.mrf.mxu0
        %v1686 = vadd.f32 0.0, %v1685
        %v1687 = vpop.f32.mrf.mxu0
        %v1688 = vadd.f32 0.0, %v1687
        %1689 = vmatprep.mubr.f32.mxu0 %v1386
        %1690 = vmatmul.mubr.f32.gmra.mxu0 %v1385
        %v1691 = vpop.f32.mrf.mxu0
        %v1692 = vadd.f32 0.0, %v1691
        %v1693 = vpop.f32.mrf.mxu0
        %v1694 = vadd.f32 0.0, %v1693
        %1695 = vmatprep.mubr.f32.mxu0 %v1388
        %1696 = vmatmul.mubr.f32.gmra.mxu0 %v1387
        %v1697 = vpop.f32.mrf.mxu0
        %v1698 = vadd.f32 0.0, %v1697
        %v1699 = vpop.f32.mrf.mxu0
        %v1700 = vadd.f32 0.0, %v1699
        %1701 = vmatprep.mubr.f32.mxu0 %v1390
        %1702 = vmatmul.mubr.f32.gmra.mxu0 %v1389
        %v1703 = vpop.f32.mrf.mxu0
        %v1704 = vadd.f32 0.0, %v1703
        %v1705 = vpop.f32.mrf.mxu0
        %v1706 = vadd.f32 0.0, %v1705
        %1707 = vmatprep.mubr.f32.mxu0 %v1392
        %1708 = vmatmul.mubr.f32.gmra.mxu0 %v1391
        %v1709 = vpop.f32.mrf.mxu0
        %v1710 = vadd.f32 0.0, %v1709
        %v1711 = vpop.f32.mrf.mxu0
        %v1712 = vadd.f32 0.0, %v1711
        %1713 = vdwg.mxu0
        %v1714 = vadd.f32 %v1262, %v1524
        %v1715 = vadd.f32 %v1263, %v1526
        %v1716 = vadd.f32 %v1264, %v1530
        %v1717 = vadd.f32 %v1265, %v1532
        %v1718 = vadd.f32 %v1266, %v1536
        %v1719 = vadd.f32 %v1267, %v1538
        %v1720 = vadd.f32 %v1268, %v1542
        %v1721 = vadd.f32 %v1269, %v1544
        %v1722 = vadd.f32 %v1270, %v1548
        %v1723 = vadd.f32 %v1271, %v1550
        %v1724 = vadd.f32 %v1272, %v1554
        %v1725 = vadd.f32 %v1273, %v1556
        %v1726 = vadd.f32 %v1274, %v1560
        %v1727 = vadd.f32 %v1275, %v1562
        %v1728 = vadd.f32 %v1276, %v1566
        %v1729 = vadd.f32 %v1277, %v1568
        %v1730 = vadd.f32 %v1278, %v1572
        %v1731 = vadd.f32 %v1279, %v1574
        %v1732 = vadd.f32 %v1280, %v1578
        %v1733 = vadd.f32 %v1281, %v1580
        %v1734 = vadd.f32 %v1282, %v1584
        %v1735 = vadd.f32 %v1283, %v1586
        %v1736 = vadd.f32 %v1284, %v1590
        %v1737 = vadd.f32 %v1285, %v1592
        %v1738 = vadd.f32 %v1286, %v1596
        %v1739 = vadd.f32 %v1287, %v1598
        %v1740 = vadd.f32 %v1288, %v1602
        %v1741 = vadd.f32 %v1289, %v1604
        %v1742 = vadd.f32 %v1290, %v1608
        %v1743 = vadd.f32 %v1291, %v1610
        %v1744 = vadd.f32 %v1292, %v1614
        %v1745 = vadd.f32 %v1293, %v1616
        %v1746 = vadd.f32 %v1294, %v1620
        %v1747 = vadd.f32 %v1295, %v1622
        %v1748 = vadd.f32 %v1296, %v1626
        %v1749 = vadd.f32 %v1297, %v1628
        %v1750 = vadd.f32 %v1298, %v1632
        %v1751 = vadd.f32 %v1299, %v1634
        %v1752 = vadd.f32 %v1300, %v1638
        %v1753 = vadd.f32 %v1301, %v1640
        %v1754 = vadd.f32 %v1302, %v1644
        %v1755 = vadd.f32 %v1303, %v1646
        %v1756 = vadd.f32 %v1304, %v1650
        %v1757 = vadd.f32 %v1305, %v1652
        %v1758 = vadd.f32 %v1306, %v1656
        %v1759 = vadd.f32 %v1307, %v1658
        %v1760 = vadd.f32 %v1308, %v1662
        %v1761 = vadd.f32 %v1309, %v1664
        %v1762 = vadd.f32 %v1310, %v1668
        %v1763 = vadd.f32 %v1311, %v1670
        %v1764 = vadd.f32 %v1312, %v1674
        %v1765 = vadd.f32 %v1313, %v1676
        %v1766 = vadd.f32 %v1314, %v1680
        %v1767 = vadd.f32 %v1315, %v1682
        %v1768 = vadd.f32 %v1316, %v1686
        %v1769 = vadd.f32 %v1317, %v1688
        %v1770 = vadd.f32 %v1318, %v1692
        %v1771 = vadd.f32 %v1319, %v1694
        %v1772 = vadd.f32 %v1320, %v1698
        %v1773 = vadd.f32 %v1321, %v1700
        %v1774 = vadd.f32 %v1322, %v1704
        %v1775 = vadd.f32 %v1323, %v1706
        %v1776 = vadd.f32 %v1324, %v1710
        %v1777 = vadd.f32 %v1325, %v1712
        %1778 = vst [vmem:[#allocation2] sm:$0xff] %v1714
        %1779 = vst [vmem:[#allocation2 + $0x8] sm:$0xff] %v1715
        %1780 = vst [vmem:[#allocation2 + $0x10] sm:$0xff] %v1716
        %1781 = vst [vmem:[#allocation2 + $0x18] sm:$0xff] %v1717
        %1782 = vst [vmem:[#allocation2 + $0x20] sm:$0xff] %v1718
        %1783 = vst [vmem:[#allocation2 + $0x28] sm:$0xff] %v1719
        %1784 = vst [vmem:[#allocation2 + $0x30] sm:$0xff] %v1720
        %1785 = vst [vmem:[#allocation2 + $0x38] sm:$0xff] %v1721
        %1786 = vst [vmem:[#allocation2 + $0x40] sm:$0xff] %v1722
        %1787 = vst [vmem:[#allocation2 + $0x48] sm:$0xff] %v1723
        %1788 = vst [vmem:[#allocation2 + $0x50] sm:$0xff] %v1724
        %1789 = vst [vmem:[#allocation2 + $0x58] sm:$0xff] %v1725
        %1790 = vst [vmem:[#allocation2 + $0x60] sm:$0xff] %v1726
        %1791 = vst [vmem:[#allocation2 + $0x68] sm:$0xff] %v1727
        %1792 = vst [vmem:[#allocation2 + $0x70] sm:$0xff] %v1728
        %1793 = vst [vmem:[#allocation2 + $0x78] sm:$0xff] %v1729
        %1794 = vst [vmem:[#allocation2 + $0x80] sm:$0xff] %v1730
        %1795 = vst [vmem:[#allocation2 + $0x88] sm:$0xff] %v1731
        %1796 = vst [vmem:[#allocation2 + $0x90] sm:$0xff] %v1732
        %1797 = vst [vmem:[#allocation2 + $0x98] sm:$0xff] %v1733
        %1798 = vst [vmem:[#allocation2 + $0xa0] sm:$0xff] %v1734
        %1799 = vst [vmem:[#allocation2 + $0xa8] sm:$0xff] %v1735
        %1800 = vst [vmem:[#allocation2 + $0xb0] sm:$0xff] %v1736
        %1801 = vst [vmem:[#allocation2 + $0xb8] sm:$0xff] %v1737
        %1802 = vst [vmem:[#allocation2 + $0xc0] sm:$0xff] %v1738
        %1803 = vst [vmem:[#allocation2 + $0xc8] sm:$0xff] %v1739
        %1804 = vst [vmem:[#allocation2 + $0xd0] sm:$0xff] %v1740
        %1805 = vst [vmem:[#allocation2 + $0xd8] sm:$0xff] %v1741
        %1806 = vst [vmem:[#allocation2 + $0xe0] sm:$0xff] %v1742
        %1807 = vst [vmem:[#allocation2 + $0xe8] sm:$0xff] %v1743
        %1808 = vst [vmem:[#allocation2 + $0xf0] sm:$0xff] %v1744
        %1809 = vst [vmem:[#allocation2 + $0xf8] sm:$0xff] %v1745
        %1810 = vst [vmem:[#allocation2 + $0x100] sm:$0xff] %v1746
        %1811 = vst [vmem:[#allocation2 + $0x108] sm:$0xff] %v1747
        %1812 = vst [vmem:[#allocation2 + $0x110] sm:$0xff] %v1748
        %1813 = vst [vmem:[#allocation2 + $0x118] sm:$0xff] %v1749
        %1814 = vst [vmem:[#allocation2 + $0x120] sm:$0xff] %v1750
        %1815 = vst [vmem:[#allocation2 + $0x128] sm:$0xff] %v1751
        %1816 = vst [vmem:[#allocation2 + $0x130] sm:$0xff] %v1752
        %1817 = vst [vmem:[#allocation2 + $0x138] sm:$0xff] %v1753
        %1818 = vst [vmem:[#allocation2 + $0x140] sm:$0xff] %v1754
        %1819 = vst [vmem:[#allocation2 + $0x148] sm:$0xff] %v1755
        %1820 = vst [vmem:[#allocation2 + $0x150] sm:$0xff] %v1756
        %1821 = vst [vmem:[#allocation2 + $0x158] sm:$0xff] %v1757
        %1822 = vst [vmem:[#allocation2 + $0x160] sm:$0xff] %v1758
        %1823 = vst [vmem:[#allocation2 + $0x168] sm:$0xff] %v1759
        %1824 = vst [vmem:[#allocation2 + $0x170] sm:$0xff] %v1760
        %1825 = vst [vmem:[#allocation2 + $0x178] sm:$0xff] %v1761
        %1826 = vst [vmem:[#allocation2 + $0x180] sm:$0xff] %v1762
        %1827 = vst [vmem:[#allocation2 + $0x188] sm:$0xff] %v1763
        %1828 = vst [vmem:[#allocation2 + $0x190] sm:$0xff] %v1764
        %1829 = vst [vmem:[#allocation2 + $0x198] sm:$0xff] %v1765
        %1830 = vst [vmem:[#allocation2 + $0x1a0] sm:$0xff] %v1766
        %1831 = vst [vmem:[#allocation2 + $0x1a8] sm:$0xff] %v1767
        %1832 = vst [vmem:[#allocation2 + $0x1b0] sm:$0xff] %v1768
        %1833 = vst [vmem:[#allocation2 + $0x1b8] sm:$0xff] %v1769
        %1834 = vst [vmem:[#allocation2 + $0x1c0] sm:$0xff] %v1770
        %1835 = vst [vmem:[#allocation2 + $0x1c8] sm:$0xff] %v1771
        %1836 = vst [vmem:[#allocation2 + $0x1d0] sm:$0xff] %v1772
        %1837 = vst [vmem:[#allocation2 + $0x1d8] sm:$0xff] %v1773
        %1838 = vst [vmem:[#allocation2 + $0x1e0] sm:$0xff] %v1774
        %1839 = vst [vmem:[#allocation2 + $0x1e8] sm:$0xff] %v1775
        %1840 = vst [vmem:[#allocation2 + $0x1f0] sm:$0xff] %v1776
        %1841 = vst [vmem:[#allocation2 + $0x1f8] sm:$0xff] %v1777
        %p1842 = scmp.eq.s32.totalorder %s37, 1
        // Predicated region
        $region49: #{tpu_custom_call.1} parent=31 // pred_check
          %p1843 = pneg %p1842
        $region50: #{tpu_custom_call.1} parent=31 // pred_check_branch
          %1845 = sbr.rel (%p1843) target = $region52
        $region51: #{tpu_custom_call.1} parent=31 // pred_region
          %v1846 = vld [vmem:[#allocation2] sm:$0xff]
          %v1847 = vld [vmem:[#allocation2 + $0x8] sm:$0xff]
          %v1848 = vld [vmem:[#allocation2 + $0x10] sm:$0xff]
          %v1849 = vld [vmem:[#allocation2 + $0x18] sm:$0xff]
          %v1850 = vld [vmem:[#allocation2 + $0x20] sm:$0xff]
          %v1851 = vld [vmem:[#allocation2 + $0x28] sm:$0xff]
          %v1852 = vld [vmem:[#allocation2 + $0x30] sm:$0xff]
          %v1853 = vld [vmem:[#allocation2 + $0x38] sm:$0xff]
          %v1854 = vld [vmem:[#allocation2 + $0x40] sm:$0xff]
          %v1855 = vld [vmem:[#allocation2 + $0x48] sm:$0xff]
          %v1856 = vld [vmem:[#allocation2 + $0x50] sm:$0xff]
          %v1857 = vld [vmem:[#allocation2 + $0x58] sm:$0xff]
          %v1858 = vld [vmem:[#allocation2 + $0x60] sm:$0xff]
          %v1859 = vld [vmem:[#allocation2 + $0x68] sm:$0xff]
          %v1860 = vld [vmem:[#allocation2 + $0x70] sm:$0xff]
          %v1861 = vld [vmem:[#allocation2 + $0x78] sm:$0xff]
          %v1862 = vld [vmem:[#allocation2 + $0x80] sm:$0xff]
          %v1863 = vld [vmem:[#allocation2 + $0x88] sm:$0xff]
          %v1864 = vld [vmem:[#allocation2 + $0x90] sm:$0xff]
          %v1865 = vld [vmem:[#allocation2 + $0x98] sm:$0xff]
          %v1866 = vld [vmem:[#allocation2 + $0xa0] sm:$0xff]
          %v1867 = vld [vmem:[#allocation2 + $0xa8] sm:$0xff]
          %v1868 = vld [vmem:[#allocation2 + $0xb0] sm:$0xff]
          %v1869 = vld [vmem:[#allocation2 + $0xb8] sm:$0xff]
          %v1870 = vld [vmem:[#allocation2 + $0xc0] sm:$0xff]
          %v1871 = vld [vmem:[#allocation2 + $0xc8] sm:$0xff]
          %v1872 = vld [vmem:[#allocation2 + $0xd0] sm:$0xff]
          %v1873 = vld [vmem:[#allocation2 + $0xd8] sm:$0xff]
          %v1874 = vld [vmem:[#allocation2 + $0xe0] sm:$0xff]
          %v1875 = vld [vmem:[#allocation2 + $0xe8] sm:$0xff]
          %v1876 = vld [vmem:[#allocation2 + $0xf0] sm:$0xff]
          %v1877 = vld [vmem:[#allocation2 + $0xf8] sm:$0xff]
          %v1878 = vld [vmem:[#allocation2 + $0x100] sm:$0xff]
          %v1879 = vld [vmem:[#allocation2 + $0x108] sm:$0xff]
          %v1880 = vld [vmem:[#allocation2 + $0x110] sm:$0xff]
          %v1881 = vld [vmem:[#allocation2 + $0x118] sm:$0xff]
          %v1882 = vld [vmem:[#allocation2 + $0x120] sm:$0xff]
          %v1883 = vld [vmem:[#allocation2 + $0x128] sm:$0xff]
          %v1884 = vld [vmem:[#allocation2 + $0x130] sm:$0xff]
          %v1885 = vld [vmem:[#allocation2 + $0x138] sm:$0xff]
          %v1886 = vld [vmem:[#allocation2 + $0x140] sm:$0xff]
          %v1887 = vld [vmem:[#allocation2 + $0x148] sm:$0xff]
          %v1888 = vld [vmem:[#allocation2 + $0x150] sm:$0xff]
          %v1889 = vld [vmem:[#allocation2 + $0x158] sm:$0xff]
          %v1890 = vld [vmem:[#allocation2 + $0x160] sm:$0xff]
          %v1891 = vld [vmem:[#allocation2 + $0x168] sm:$0xff]
          %v1892 = vld [vmem:[#allocation2 + $0x170] sm:$0xff]
          %v1893 = vld [vmem:[#allocation2 + $0x178] sm:$0xff]
          %v1894 = vld [vmem:[#allocation2 + $0x180] sm:$0xff]
          %v1895 = vld [vmem:[#allocation2 + $0x188] sm:$0xff]
          %v1896 = vld [vmem:[#allocation2 + $0x190] sm:$0xff]
          %v1897 = vld [vmem:[#allocation2 + $0x198] sm:$0xff]
          %v1898 = vld [vmem:[#allocation2 + $0x1a0] sm:$0xff]
          %v1899 = vld [vmem:[#allocation2 + $0x1a8] sm:$0xff]
          %v1900 = vld [vmem:[#allocation2 + $0x1b0] sm:$0xff]
          %v1901 = vld [vmem:[#allocation2 + $0x1b8] sm:$0xff]
          %v1902 = vld [vmem:[#allocation2 + $0x1c0] sm:$0xff]
          %v1903 = vld [vmem:[#allocation2 + $0x1c8] sm:$0xff]
          %v1904 = vld [vmem:[#allocation2 + $0x1d0] sm:$0xff]
          %v1905 = vld [vmem:[#allocation2 + $0x1d8] sm:$0xff]
          %v1906 = vld [vmem:[#allocation2 + $0x1e0] sm:$0xff]
          %v1907 = vld [vmem:[#allocation2 + $0x1e8] sm:$0xff]
          %v1908 = vld [vmem:[#allocation2 + $0x1f0] sm:$0xff]
          %v1909 = vld [vmem:[#allocation2 + $0x1f8] sm:$0xff]
          %v1910 = vmul.f32 %v1846, 1.4285715
          %v1911 = vmul.f32 %v1847, 1.4285715
          %v1912 = vmul.f32 %v1848, 1.4285715
          %v1913 = vmul.f32 %v1849, 1.4285715
          %v1914 = vmul.f32 %v1850, 1.4285715
          %v1915 = vmul.f32 %v1851, 1.4285715
          %v1916 = vmul.f32 %v1852, 1.4285715
          %v1917 = vmul.f32 %v1853, 1.4285715
          %v1918 = vmul.f32 %v1854, 1.4285715
          %v1919 = vmul.f32 %v1855, 1.4285715
          %v1920 = vmul.f32 %v1856, 1.4285715
          %v1921 = vmul.f32 %v1857, 1.4285715
          %v1922 = vmul.f32 %v1858, 1.4285715
          %v1923 = vmul.f32 %v1859, 1.4285715
          %v1924 = vmul.f32 %v1860, 1.4285715
          %v1925 = vmul.f32 %v1861, 1.4285715
          %v1926 = vmul.f32 %v1862, 1.4285715
          %v1927 = vmul.f32 %v1863, 1.4285715
          %v1928 = vmul.f32 %v1864, 1.4285715
          %v1929 = vmul.f32 %v1865, 1.4285715
          %v1930 = vmul.f32 %v1866, 1.4285715
          %v1931 = vmul.f32 %v1867, 1.4285715
          %v1932 = vmul.f32 %v1868, 1.4285715
          %v1933 = vmul.f32 %v1869, 1.4285715
          %v1934 = vmul.f32 %v1870, 1.4285715
          %v1935 = vmul.f32 %v1871, 1.4285715
          %v1936 = vmul.f32 %v1872, 1.4285715
          %v1937 = vmul.f32 %v1873, 1.4285715
          %v1938 = vmul.f32 %v1874, 1.4285715
          %v1939 = vmul.f32 %v1875, 1.4285715
          %v1940 = vmul.f32 %v1876, 1.4285715
          %v1941 = vmul.f32 %v1877, 1.4285715
          %v1942 = vmul.f32 %v1878, 1.4285715
          %v1943 = vmul.f32 %v1879, 1.4285715
          %v1944 = vmul.f32 %v1880, 1.4285715
          %v1945 = vmul.f32 %v1881, 1.4285715
          %v1946 = vmul.f32 %v1882, 1.4285715
          %v1947 = vmul.f32 %v1883, 1.4285715
          %v1948 = vmul.f32 %v1884, 1.4285715
          %v1949 = vmul.f32 %v1885, 1.4285715
          %v1950 = vmul.f32 %v1886, 1.4285715
          %v1951 = vmul.f32 %v1887, 1.4285715
          %v1952 = vmul.f32 %v1888, 1.4285715
          %v1953 = vmul.f32 %v1889, 1.4285715
          %v1954 = vmul.f32 %v1890, 1.4285715
          %v1955 = vmul.f32 %v1891, 1.4285715
          %v1956 = vmul.f32 %v1892, 1.4285715
          %v1957 = vmul.f32 %v1893, 1.4285715
          %v1958 = vmul.f32 %v1894, 1.4285715
          %v1959 = vmul.f32 %v1895, 1.4285715
          %v1960 = vmul.f32 %v1896, 1.4285715
          %v1961 = vmul.f32 %v1897, 1.4285715
          %v1962 = vmul.f32 %v1898, 1.4285715
          %v1963 = vmul.f32 %v1899, 1.4285715
          %v1964 = vmul.f32 %v1900, 1.4285715
          %v1965 = vmul.f32 %v1901, 1.4285715
          %v1966 = vmul.f32 %v1902, 1.4285715
          %v1967 = vmul.f32 %v1903, 1.4285715
          %v1968 = vmul.f32 %v1904, 1.4285715
          %v1969 = vmul.f32 %v1905, 1.4285715
          %v1970 = vmul.f32 %v1906, 1.4285715
          %v1971 = vmul.f32 %v1907, 1.4285715
          %v1972 = vmul.f32 %v1908, 1.4285715
          %v1973 = vmul.f32 %v1909, 1.4285715
          %v1974 = vld [vmem:[%s323] sm:$0x3]
          %v1976 = vlaneseq
          %v1977 = vshrl.u32 %v1976, 7
          %v1978 = vsub.s32 0, %v1977
          %v1979 = vrot.slane %v1974, %v1978
          %v1980 = vlaneseq
          %v1981 = vshrl.u32 %v1980, 7
          %v1982 = vsub.s32 1, %v1981
          %v1983 = vrot.slane %v1974, %v1982
          %v1986 = vadd.f32 %v1910, %v1979
          %v1987 = vadd.f32 %v1911, %v1983
          %v1988 = vadd.f32 %v1912, %v1979
          %v1989 = vadd.f32 %v1913, %v1983
          %v1990 = vadd.f32 %v1914, %v1979
          %v1991 = vadd.f32 %v1915, %v1983
          %v1992 = vadd.f32 %v1916, %v1979
          %v1993 = vadd.f32 %v1917, %v1983
          %v1994 = vadd.f32 %v1918, %v1979
          %v1995 = vadd.f32 %v1919, %v1983
          %v1996 = vadd.f32 %v1920, %v1979
          %v1997 = vadd.f32 %v1921, %v1983
          %v1998 = vadd.f32 %v1922, %v1979
          %v1999 = vadd.f32 %v1923, %v1983
          %v2000 = vadd.f32 %v1924, %v1979
          %v2001 = vadd.f32 %v1925, %v1983
          %v2002 = vadd.f32 %v1926, %v1979
          %v2003 = vadd.f32 %v1927, %v1983
          %v2004 = vadd.f32 %v1928, %v1979
          %v2005 = vadd.f32 %v1929, %v1983
          %v2006 = vadd.f32 %v1930, %v1979
          %v2007 = vadd.f32 %v1931, %v1983
          %v2008 = vadd.f32 %v1932, %v1979
          %v2009 = vadd.f32 %v1933, %v1983
          %v2010 = vadd.f32 %v1934, %v1979
          %v2011 = vadd.f32 %v1935, %v1983
          %v2012 = vadd.f32 %v1936, %v1979
          %v2013 = vadd.f32 %v1937, %v1983
          %v2014 = vadd.f32 %v1938, %v1979
          %v2015 = vadd.f32 %v1939, %v1983
          %v2016 = vadd.f32 %v1940, %v1979
          %v2017 = vadd.f32 %v1941, %v1983
          %2018 = vst [vmem:[%s308] sm:$0xff] %v1986
          %2019 = vst [vmem:[%s308 + $0x8] sm:$0xff] %v1987
          %2020 = vst [vmem:[%s308 + $0x10] sm:$0xff] %v1988
          %2021 = vst [vmem:[%s308 + $0x18] sm:$0xff] %v1989
          %2022 = vst [vmem:[%s308 + $0x20] sm:$0xff] %v1990
          %2023 = vst [vmem:[%s308 + $0x28] sm:$0xff] %v1991
          %2024 = vst [vmem:[%s308 + $0x30] sm:$0xff] %v1992
          %2025 = vst [vmem:[%s308 + $0x38] sm:$0xff] %v1993
          %2026 = vst [vmem:[%s308 + $0x40] sm:$0xff] %v1994
          %2027 = vst [vmem:[%s308 + $0x48] sm:$0xff] %v1995
          %2028 = vst [vmem:[%s308 + $0x50] sm:$0xff] %v1996
          %2029 = vst [vmem:[%s308 + $0x58] sm:$0xff] %v1997
          %2030 = vst [vmem:[%s308 + $0x60] sm:$0xff] %v1998
          %2031 = vst [vmem:[%s308 + $0x68] sm:$0xff] %v1999
          %2032 = vst [vmem:[%s308 + $0x70] sm:$0xff] %v2000
          %2033 = vst [vmem:[%s308 + $0x78] sm:$0xff] %v2001
          %2034 = vst [vmem:[%s308 + $0x80] sm:$0xff] %v2002
          %2035 = vst [vmem:[%s308 + $0x88] sm:$0xff] %v2003
          %2036 = vst [vmem:[%s308 + $0x90] sm:$0xff] %v2004
          %2037 = vst [vmem:[%s308 + $0x98] sm:$0xff] %v2005
          %2038 = vst [vmem:[%s308 + $0xa0] sm:$0xff] %v2006
          %2039 = vst [vmem:[%s308 + $0xa8] sm:$0xff] %v2007
          %2040 = vst [vmem:[%s308 + $0xb0] sm:$0xff] %v2008
          %2041 = vst [vmem:[%s308 + $0xb8] sm:$0xff] %v2009
          %2042 = vst [vmem:[%s308 + $0xc0] sm:$0xff] %v2010
          %2043 = vst [vmem:[%s308 + $0xc8] sm:$0xff] %v2011
          %2044 = vst [vmem:[%s308 + $0xd0] sm:$0xff] %v2012
          %2045 = vst [vmem:[%s308 + $0xd8] sm:$0xff] %v2013
          %2046 = vst [vmem:[%s308 + $0xe0] sm:$0xff] %v2014
          %2047 = vst [vmem:[%s308 + $0xe8] sm:$0xff] %v2015
          %2048 = vst [vmem:[%s308 + $0xf0] sm:$0xff] %v2016
          %2049 = vst [vmem:[%s308 + $0xf8] sm:$0xff] %v2017
          %v2050 = vmul.f32 %v1942, %v1942
          %v2051 = vmul.f32 %v1943, %v1943
          %v2052 = vmul.f32 %v1944, %v1944
          %v2053 = vmul.f32 %v1945, %v1945
          %v2054 = vmul.f32 %v1946, %v1946
          %v2055 = vmul.f32 %v1947, %v1947
          %v2056 = vmul.f32 %v1948, %v1948
          %v2057 = vmul.f32 %v1949, %v1949
          %v2058 = vmul.f32 %v1950, %v1950
          %v2059 = vmul.f32 %v1951, %v1951
          %v2060 = vmul.f32 %v1952, %v1952
          %v2061 = vmul.f32 %v1953, %v1953
          %v2062 = vmul.f32 %v1954, %v1954
          %v2063 = vmul.f32 %v1955, %v1955
          %v2064 = vmul.f32 %v1956, %v1956
          %v2065 = vmul.f32 %v1957, %v1957
          %v2066 = vmul.f32 %v1958, %v1958
          %v2067 = vmul.f32 %v1959, %v1959
          %v2068 = vmul.f32 %v1960, %v1960
          %v2069 = vmul.f32 %v1961, %v1961
          %v2070 = vmul.f32 %v1962, %v1962
          %v2071 = vmul.f32 %v1963, %v1963
          %v2072 = vmul.f32 %v1964, %v1964
          %v2073 = vmul.f32 %v1965, %v1965
          %v2074 = vmul.f32 %v1966, %v1966
          %v2075 = vmul.f32 %v1967, %v1967
          %v2076 = vmul.f32 %v1968, %v1968
          %v2077 = vmul.f32 %v1969, %v1969
          %v2078 = vmul.f32 %v1970, %v1970
          %v2079 = vmul.f32 %v1971, %v1971
          %v2080 = vmul.f32 %v1972, %v1972
          %v2081 = vmul.f32 %v1973, %v1973
          %v2082 = vadd.f32 %v2050, %v2051
          %v2083 = vadd.f32 %v2082, %v2052
          %v2084 = vadd.f32 %v2083, %v2053
          %v2085 = vadd.f32 %v2084, %v2054
          %v2086 = vadd.f32 %v2085, %v2055
          %v2087 = vadd.f32 %v2086, %v2056
          %v2088 = vadd.f32 %v2087, %v2057
          %v2089 = vadd.f32 %v2088, %v2058
          %v2090 = vadd.f32 %v2089, %v2059
          %v2091 = vadd.f32 %v2090, %v2060
          %v2092 = vadd.f32 %v2091, %v2061
          %v2093 = vadd.f32 %v2092, %v2062
          %v2094 = vadd.f32 %v2093, %v2063
          %v2095 = vadd.f32 %v2094, %v2064
          %v2096 = vadd.f32 %v2095, %v2065
          %v2097 = vadd.f32 %v2096, %v2066
          %v2098 = vadd.f32 %v2097, %v2067
          %v2099 = vadd.f32 %v2098, %v2068
          %v2100 = vadd.f32 %v2099, %v2069
          %v2101 = vadd.f32 %v2100, %v2070
          %v2102 = vadd.f32 %v2101, %v2071
          %v2103 = vadd.f32 %v2102, %v2072
          %v2104 = vadd.f32 %v2103, %v2073
          %v2105 = vadd.f32 %v2104, %v2074
          %v2106 = vadd.f32 %v2105, %v2075
          %v2107 = vadd.f32 %v2106, %v2076
          %v2108 = vadd.f32 %v2107, %v2077
          %v2109 = vadd.f32 %v2108, %v2078
          %v2110 = vadd.f32 %v2109, %v2079
          %v2111 = vadd.f32 %v2110, %v2080
          %v2112 = vadd.f32 %v2111, %v2081
          %2113 = vadd.xlane.f32.xlu0 %v2112
          %v2114 = vpop.xlane.xlu0 %2113
          %v2115 = vrot.slane %v2114, 4
          %v2116 = vadd.f32 %v2114, %v2115
          %v2117 = vrot.slane %v2116, 2
          %v2118 = vadd.f32 %v2116, %v2117
          %v2119 = vrot.slane %v2118, 1
          %v2120 = vadd.f32 %v2118, %v2119
          %s2121 = vtos %v2120
          %v2122 = vstv %s2121
          %2123 = vst [vmem:[%s315] sm:$0xff] %v2122
        $region52: #{tpu_custom_call.1} parent=31 // pred_fallthru
          _
        %s2124 = sand.u32 %s141, 1
        %s2125 = scalar_lea.sflag [#allocation8], %s2124
        %s2126 = sand.u32 %s141, 1
        %s2127 = smul.addr %s2126, 256
        %s2128 = scalar_lea.vmem [#allocation11], %s2127
        %s2129 = sand.u32 %s169, 1
        %s2130 = scalar_lea.sflag [#allocation13], %s2129
        %s2131 = sand.u32 %s169, 1
        %s2132 = smul.addr %s2131, 8
        %s2133 = scalar_lea.vmem [#allocation12], %s2132
        // Predicated region
        $region53: #{tpu_custom_call.1} parent=31 // pred_check
          %p2134 = pneg %p151
        $region54: #{tpu_custom_call.1} parent=31 // pred_check_branch
          %2136 = sbr.rel (%p2134) target = $region56
        $region55: #{tpu_custom_call.1} parent=31 // pred_region
          %s2137 = smul.u32 16, %s35
          %s2138 = smul.u32 2, %s36
          %s2140 = ssub.s32 4096, 4096
          %2141 = vsyncadd %s2125, %s2140
          %s2142 = smul.addr %s2137, 4
          %s2143 = sadd.s32 %s2138, %s2142
          %s2144 = smul.addr %s2143, 128
          %s2145 = scalar_lea.hbm %s4, %s2144
          %s2146 = sshll.u32 %s2128, 4
          %s2147 = int_to_ptr.vmem [resolvable:$true] %s2146
          %2152 = dma.vmem_to_hbm [thread:$0]  %s2147, 4096, %s2145, %s2125, 256, 512, 16
        $region56: #{tpu_custom_call.1} parent=31 // pred_fallthru
          _
        // Predicated region
        $region57: #{tpu_custom_call.1} parent=31 // pred_check
          %p2153 = pneg %p179
        $region58: #{tpu_custom_call.1} parent=31 // pred_check_branch
          %2155 = sbr.rel (%p2153) target = $region60
        $region59: #{tpu_custom_call.1} parent=31 // pred_region
          %s2157 = ssub.s32 128, 128
          %2158 = vsyncadd %s2130, %s2157
          %s2159 = smul.addr %s35, 2
          %s2160 = sadd.s32 %s36, %s2159
          %s2161 = smul.addr %s2160, 128
          %s2162 = scalar_lea.hbm %s5, %s2161
          %s2164 = sshll.u32 %s2133, 4
          %s2165 = int_to_ptr.vmem [resolvable:$true] %s2164
          %2167 = dma.vmem_to_hbm [thread:$0]  %s2165, 128, %s2162, %s2130
        $region60: #{tpu_custom_call.1} parent=31 // pred_fallthru
          _
      $region32: #{tpu_custom_call.1} parent=5 // pred_fallthru
        _
      %p2168 = scmp.le.s32.totalorder 2, %s25
      // Predicated region
      $region61: #{tpu_custom_call.1} parent=5 // pred_check
        %p2169 = pneg %p2168
      $region62: #{tpu_custom_call.1} parent=5 // pred_check_branch
        %2171 = sbr.rel (%p2169) target = $region64
      $region63: #{tpu_custom_call.1} parent=5 // pred_region
        %s2172 = ssub.s32 %s25, 2
        // Predicated region
        $region65: #{tpu_custom_call.1} parent=63 // pred_check
          %p2173 = pneg %p157
        $region66: #{tpu_custom_call.1} parent=63 // pred_check_branch
          %2175 = sbr.rel (%p2173) target = $region68
        $region67: #{tpu_custom_call.1} parent=63 // pred_region
          %s2176 = sand.u32 %s142, 1
          %s2177 = scalar_lea.sflag [#allocation8], %s2176
          %s2178 = sand.u32 %s142, 1
          %s2179 = smul.addr %s2178, 256
          %s2180 = scalar_lea.vmem [#allocation11], %s2179
          %2181 = dma.done %s2177, 4096
        $region68: #{tpu_custom_call.1} parent=63 // pred_fallthru
          _
        // Predicated region
        $region69: #{tpu_custom_call.1} parent=63 // pred_check
          %p2182 = pneg %p185
        $region70: #{tpu_custom_call.1} parent=63 // pred_check_branch
          %2184 = sbr.rel (%p2182) target = $region72
        $region71: #{tpu_custom_call.1} parent=63 // pred_region
          %s2185 = sand.u32 %s170, 1
          %s2186 = scalar_lea.sflag [#allocation13], %s2185
          %s2187 = sand.u32 %s170, 1
          %s2188 = smul.addr %s2187, 8
          %s2189 = scalar_lea.vmem [#allocation12], %s2188
          %2190 = dma.done %s2186, 128
        $region72: #{tpu_custom_call.1} parent=63 // pred_fallthru
          _
      $region64: #{tpu_custom_call.1} parent=5 // pred_fallthru
        _
    $region6: #{tpu_custom_call.1} parent=1 // loop_footer
      %s29 = sadd.s32 1, %s25
    $region7: #{tpu_custom_call.1} parent=1 // loop_footer_branch
      %24 = sbr.rel target = $region3
    $region8: #{tpu_custom_call.1} parent=1 // loop_exit
      _
    %2191 = vsyncpa [#allocation7], 1
    %s2192 = scalar_lea.sflag [#allocation7], 1
    %2193 = vsyncpa %s2192, 1
    %2194 = vsyncpa [#allocation10], 1
    %s2195 = scalar_lea.sflag [#allocation10], 1
    %2196 = vsyncpa %s2195, 1
    %2197 = vsyncpa [#allocation8], 1
    %s2198 = scalar_lea.sflag [#allocation8], 1
    %2199 = vsyncpa %s2198, 1
    %2200 = vsyncpa [#allocation13], 1
    %s2201 = scalar_lea.sflag [#allocation13], 1
    %2202 = vsyncpa %s2201, 1

</llo_original>
